<compile_context>
chip_gen: v5e
topology: v5e:2x2
jax: 0.10.0
libtpu: 0.0.40
codegen_flags: <defaults>
</compile_context>

<pallas_src>
import functools

import jax
import jax.numpy as jnp
from jax.experimental import pallas as pl
from jax.experimental.pallas import tpu as pltpu


# ----------------------------- helpers ---------------------------------------

def _layernorm(x, g, b, eps=1e-12):
    mu = jnp.mean(x, axis=-1, keepdims=True)
    var = jnp.mean((x - mu) ** 2, axis=-1, keepdims=True)
    return (x - mu) * jax.lax.rsqrt(var + eps) * g + b


# --------------------------- fused Pallas kernel ------------------------------

def _fused_bert_kernel(vl_ref,                      # SMEM (B,) int32, scalar-prefetched
                       x_ref,                       # (S, H) f32 embeddings sum (this batch)
                       elng_ref, elnb_ref,          # emb LayerNorm
                       wqkv_ref, wo_ref,            # attention weights (QKV fused, bf16)
                       ln1g_ref, ln1b_ref,
                       w1_ref, b1_ref, w2_ref, b2_ref,
                       ln2g_ref, ln2b_ref,
                       wp_ref, bp_ref,              # pooler
                       wc_ref, bc_ref,              # classifier (lane-padded to 128)
                       out_ref):                    # (1, 128) logits slab for this batch
    S, H = x_ref.shape
    b = pl.program_id(0)

    # ---- embedding LayerNorm (f32) ----
    x = _layernorm(x_ref[...], elng_ref[...], elnb_ref[...])          # (S, H) f32

    # ---- attention-mask bias for this batch element: (1, S), broadcast over q rows ----
    vl = vl_ref[b]
    col = jax.lax.broadcasted_iota(jnp.int32, (1, S), 1)
    bias = jnp.where(col < vl, 0.0, -1e9).astype(jnp.float32)         # (1, S) f32

    # ---- single fused QKV matmul (bf16 in, f32 accumulate) ----
    xb = x.astype(jnp.bfloat16)
    qkv = jnp.dot(xb, wqkv_ref[...], preferred_element_type=jnp.float32)   # (S, 3H) f32
    q = qkv[:, :H].astype(jnp.bfloat16)
    k = qkv[:, H:2 * H].astype(jnp.bfloat16)
    v = qkv[:, 2 * H:].astype(jnp.bfloat16)

    # 1/sqrt(H) scale already folded into the Q third of wqkv at prep time.
    # Contract both last dims -> no explicit k.T transpose on the XLU.
    scores = jax.lax.dot_general(q, k, (((1,), (1,)), ((), ())),
                                 preferred_element_type=jnp.float32) + bias
    smax = jnp.max(scores, axis=-1, keepdims=True)
    p = jnp.exp(scores - smax)
    # EUP approximate reciprocal instead of a full-precision divide.
    attn = p * pl.reciprocal(jnp.sum(p, axis=-1, keepdims=True), approx=True)

    ctx = jnp.dot(attn.astype(jnp.bfloat16), v, preferred_element_type=jnp.float32)
    attn_out = jnp.dot(ctx.astype(jnp.bfloat16), wo_ref[...],
                       preferred_element_type=jnp.float32)
    h = _layernorm(x + attn_out, ln1g_ref[...], ln1b_ref[...])        # f32

    ffn = jnp.dot(h.astype(jnp.bfloat16), w1_ref[...],
                  preferred_element_type=jnp.float32) + b1_ref[...]
    ffn = jax.nn.gelu(ffn, approximate=True)
    ffn = jnp.dot(ffn.astype(jnp.bfloat16), w2_ref[...],
                  preferred_element_type=jnp.float32) + b2_ref[...]
    enc = _layernorm(h + ffn, ln2g_ref[...], ln2b_ref[...])           # f32

    # ---- pooler ([CLS] = row 0 of this batch tile) + classifier ----
    cls = enc[0:1, :]                                                  # (1, H)
    pooled = jnp.tanh(jnp.dot(cls.astype(jnp.bfloat16), wp_ref[...],
                              preferred_element_type=jnp.float32) + bp_ref[...])
    # nn.Dropout(p=dr_rate) is the identity at inference (eval mode).
    out_ref[...] = (jnp.dot(pooled.astype(jnp.bfloat16), wc_ref[...],
                            preferred_element_type=jnp.float32) + bc_ref[...])


# --------------------------- one-time parameter prep ---------------------------

def prepare_params(params, c_pad=128):
    """Hoisted, one-time prep: QKV fusion + scale folding, bf16 weights, lane-pad wc."""
    H = params['wq'].shape[0]
    C = params['wc'].shape[1]
    scale = 1.0 / jnp.sqrt(jnp.float32(H))
    wqkv = jnp.concatenate([params['wq'] * scale, params['wk'], params['wv']], axis=1)
    bf = lambda a: a.astype(jnp.bfloat16)
    return dict(
        word_emb=params['word_emb'], seg_emb=params['seg_emb'], pos_emb=params['pos_emb'],
        emb_ln_g=params['emb_ln_g'], emb_ln_b=params['emb_ln_b'],
        wqkv=bf(wqkv), wo=bf(params['wo']),
        ln1_g=params['ln1_g'], ln1_b=params['ln1_b'],
        w1=bf(params['w1']), b1=params['b1'],
        w2=bf(params['w2']), b2=params['b2'],
        ln2_g=params['ln2_g'], ln2_b=params['ln2_b'],
        wp=bf(params['wp']), bp=params['bp'],
        wc_pad=bf(jnp.pad(params['wc'], ((0, 0), (0, c_pad - C)))),
        bc_pad=jnp.pad(params['bc'], ((0, 0), (0, c_pad - C))),
        num_classes=C, c_pad=c_pad,
    )


# ------------------------------ wrapper ----------------------------------------

def bert_classifier_forward(p, token_ids, valid_length, segment_ids, *,
                            single_buffer_weights=True):
    B, S = token_ids.shape
    H = p['word_emb'].shape[1]
    H4 = p['w1'].shape[1]
    C = p['num_classes']
    C_PAD = p['c_pad']

    # --- embeddings (glue: gathers in plain JAX; LayerNorm happens in-kernel) ---
    x = (p['word_emb'][token_ids]
         + p['seg_emb'][segment_ids]
         + p['pos_emb'][None, :S, :]).astype(jnp.float32)              # (B, S, H) f32

    # Weights/biases: constant block index across the batch grid -> single buffer.
    def wspec(shape):
        idx = lambda b, vl, _n=len(shape): (0,) * _n
        if single_buffer_weights:
            return pl.BlockSpec(shape, idx, pipeline_mode=pl.Buffered(1))
        return pl.BlockSpec(shape, idx)

    logits_pad = pl.pallas_call(
        _fused_bert_kernel,
        out_shape=jax.ShapeDtypeStruct((B, 1, C_PAD), jnp.float32),
        grid_spec=pltpu.PrefetchScalarGridSpec(
            num_scalar_prefetch=1,
            grid=(B,),                                   # one batch element per step
            in_specs=[
                pl.BlockSpec((None, S, H), lambda b, vl: (b, 0, 0)),   # x batch tile
                wspec((1, H)), wspec((1, H)),            # emb LN gamma/beta
                wspec((H, 3 * H)), wspec((H, H)),        # wqkv (scaled Q), wo
                wspec((1, H)), wspec((1, H)),            # LN1 gamma/beta
                wspec((H, H4)), wspec((1, H4)),          # FFN W1/b1
                wspec((H4, H)), wspec((1, H)),           # FFN W2/b2
                wspec((1, H)), wspec((1, H)),            # LN2 gamma/beta
                wspec((H, H)), wspec((1, H)),            # pooler W/b
                wspec((H, C_PAD)), wspec((1, C_PAD)),    # classifier W/b (lane-padded)
            ],
            out_specs=pl.BlockSpec((None, 1, C_PAD), lambda b, vl: (b, 0, 0)),
        ),
        compiler_params=pltpu.CompilerParams(
            dimension_semantics=("parallel",),           # shard batches across TCs (v7x)
            vmem_limit_bytes=48 * 1024 * 1024),
    )(valid_length.astype(jnp.int32), x,
      p['emb_ln_g'], p['emb_ln_b'],
      p['wqkv'], p['wo'], p['ln1_g'], p['ln1_b'],
      p['w1'], p['b1'], p['w2'], p['b2'],
      p['ln2_g'], p['ln2_b'],
      p['wp'], p['bp'], p['wc_pad'], p['bc_pad'])

    return logits_pad[:, 0, :C]


# --------------------------- pure-JAX reference --------------------------------

def reference_forward(params, token_ids, valid_length, segment_ids):
    B, S = token_ids.shape
    pos = jnp.arange(S)[None, :]
    mask = (pos < valid_length[:, None]).astype(jnp.float32)
    x = (params['word_emb'][token_ids] + params['seg_emb'][segment_ids]
         + params['pos_emb'][None, :S, :])
    x = _layernorm(x, params['emb_ln_g'], params['emb_ln_b'])
    scale = 1.0 / jnp.sqrt(jnp.float32(x.shape[-1]))
    q, k, v = x @ params['wq'], x @ params['wk'], x @ params['wv']
    scores = jnp.einsum('bqd,bkd->bqk', q, k) * scale + (mask[:, None, :] - 1.0) * 1e9
    attn = jax.nn.softmax(scores, axis=-1)
    h = _layernorm(x + jnp.einsum('bqk,bkd->bqd', attn, v) @ params['wo'],
                   params['ln1_g'], params['ln1_b'])
    ffn = (jax.nn.gelu(h @ params['w1'] + params['b1'], approximate=True)
           @ params['w2'] + params['b2'])
    enc = _layernorm(h + ffn, params['ln2_g'], params['ln2_b'])
    pooled = jnp.tanh(enc[:, 0, :] @ params['wp'] + params['bp'])
    return pooled @ params['wc'] + params['bc']


# ------------------------------ params init -----------------------------------

def init_params(key, vocab=64, seq=8, H=32, C=7, types=2):
    ks = jax.random.split(key, 12)
    lin = lambda k, i, o: (jax.random.normal(k, (i, o), jnp.float32) * 0.05)
    return dict(
        word_emb=jax.random.normal(ks[0], (vocab, H), jnp.float32) * 0.05,
        seg_emb=jax.random.normal(ks[1], (types, H), jnp.float32) * 0.05,
        pos_emb=jax.random.normal(ks[2], (seq, H), jnp.float32) * 0.05,
        emb_ln_g=jnp.ones((1, H), jnp.float32), emb_ln_b=jnp.zeros((1, H), jnp.float32),
        wq=lin(ks[3], H, H), wk=lin(ks[4], H, H), wv=lin(ks[5], H, H), wo=lin(ks[6], H, H),
        ln1_g=jnp.ones((1, H), jnp.float32), ln1_b=jnp.zeros((1, H), jnp.float32),
        w1=lin(ks[7], H, 4 * H), b1=jnp.zeros((1, 4 * H), jnp.float32),
        w2=lin(ks[8], 4 * H, H), b2=jnp.zeros((1, H), jnp.float32),
        ln2_g=jnp.ones((1, H), jnp.float32), ln2_b=jnp.zeros((1, H), jnp.float32),
        wp=lin(ks[9], H, H), bp=jnp.zeros((1, H), jnp.float32),
        wc=lin(ks[10], H, C), bc=jnp.zeros((1, C), jnp.float32),
    )


# ------------------------------------ main -------------------------------------

if __name__ == "__main__":
    B, S, H, C, VOCAB = 2, 8, 32, 7, 64
    key = jax.random.PRNGKey(0)
    pkey, tkey = jax.random.split(key, 2)

    params = init_params(pkey, vocab=VOCAB, seq=S, H=H, C=C)
    prepared = prepare_params(params)   # one-time: QKV fusion, scale fold, bf16, lane pad

    token_ids = jax.random.randint(tkey, (B, S), 0, VOCAB, dtype=jnp.int32)
    segment_ids = jnp.zeros((B, S), dtype=jnp.int32)
    valid_length = jnp.array([5, 8], dtype=jnp.int32)   # NOTE: valid_length > 0 assumed

    def run(single_buffer_weights):
        fwd = jax.jit(functools.partial(bert_classifier_forward, prepared,
                                        single_buffer_weights=single_buffer_weights))
        out = fwd(token_ids, valid_length, segment_ids)
        jax.block_until_ready(out)
        return out

    try:
        logits = run(True)
    except Exception:
        # Fallback if this JAX build rejects pipeline_mode=pl.Buffered(1) on the
        # top-level pallas_call pipeline; semantics are identical.
        logits = run(False)

    ref = reference_forward(params, token_ids, valid_length, segment_ids)
    assert logits.shape == (B, C), logits.shape
    # Tolerance 1e-2: bf16 MXU inputs + EUP approximate reciprocal in the softmax.
    assert jnp.allclose(logits, ref, atol=1e-2, rtol=1e-2), (logits, ref)

    print("KERNEL_OK")
</pallas_src>

<mosaic_0001>
module attributes {stable_mosaic.version = 11 : i64} {
  func.func @_fused_bert_kernel(%arg0: i32, %arg1: memref<2xi32, #tpu.memory_space<smem>>, %arg2: memref<1x8x32xf32, #tpu.memory_space<vmem>>, %arg3: memref<1x32xf32, #tpu.memory_space<vmem>>, %arg4: memref<1x32xf32, #tpu.memory_space<vmem>>, %arg5: memref<32x96xbf16, #tpu.memory_space<vmem>>, %arg6: memref<32x32xbf16, #tpu.memory_space<vmem>>, %arg7: memref<1x32xf32, #tpu.memory_space<vmem>>, %arg8: memref<1x32xf32, #tpu.memory_space<vmem>>, %arg9: memref<32x128xbf16, #tpu.memory_space<vmem>>, %arg10: memref<1x128xf32, #tpu.memory_space<vmem>>, %arg11: memref<128x32xbf16, #tpu.memory_space<vmem>>, %arg12: memref<1x32xf32, #tpu.memory_space<vmem>>, %arg13: memref<1x32xf32, #tpu.memory_space<vmem>>, %arg14: memref<1x32xf32, #tpu.memory_space<vmem>>, %arg15: memref<32x32xbf16, #tpu.memory_space<vmem>>, %arg16: memref<1x32xf32, #tpu.memory_space<vmem>>, %arg17: memref<32x128xbf16, #tpu.memory_space<vmem>>, %arg18: memref<1x128xf32, #tpu.memory_space<vmem>>, %arg19: memref<1x1x128xf32, #tpu.memory_space<vmem>>) attributes {dimension_semantics = [#tpu.dimension_semantics<parallel>], iteration_bounds = array<i64: 2>, scalar_prefetch = 1 : i64, scratch_operands = 0 : i64, tpu.core_type = #tpu.core_type<tc>, window_params = [{transform_indices = @transform_0, window_bounds = array<i64: 1, 8, 32>}, {pipeline_mode = #tpu.pipeline_mode<synchronous>, transform_indices = @transform_1, window_bounds = array<i64: 1, 32>}, {pipeline_mode = #tpu.pipeline_mode<synchronous>, transform_indices = @transform_2, window_bounds = array<i64: 1, 32>}, {pipeline_mode = #tpu.pipeline_mode<synchronous>, transform_indices = @transform_3, window_bounds = array<i64: 32, 96>}, {pipeline_mode = #tpu.pipeline_mode<synchronous>, transform_indices = @transform_4, window_bounds = array<i64: 32, 32>}, {pipeline_mode = #tpu.pipeline_mode<synchronous>, transform_indices = @transform_5, window_bounds = array<i64: 1, 32>}, {pipeline_mode = #tpu.pipeline_mode<synchronous>, transform_indices = @transform_6, window_bounds = array<i64: 1, 32>}, {pipeline_mode = #tpu.pipeline_mode<synchronous>, transform_indices = @transform_7, window_bounds = array<i64: 32, 128>}, {pipeline_mode = #tpu.pipeline_mode<synchronous>, transform_indices = @transform_8, window_bounds = array<i64: 1, 128>}, {pipeline_mode = #tpu.pipeline_mode<synchronous>, transform_indices = @transform_9, window_bounds = array<i64: 128, 32>}, {pipeline_mode = #tpu.pipeline_mode<synchronous>, transform_indices = @transform_10, window_bounds = array<i64: 1, 32>}, {pipeline_mode = #tpu.pipeline_mode<synchronous>, transform_indices = @transform_11, window_bounds = array<i64: 1, 32>}, {pipeline_mode = #tpu.pipeline_mode<synchronous>, transform_indices = @transform_12, window_bounds = array<i64: 1, 32>}, {pipeline_mode = #tpu.pipeline_mode<synchronous>, transform_indices = @transform_13, window_bounds = array<i64: 32, 32>}, {pipeline_mode = #tpu.pipeline_mode<synchronous>, transform_indices = @transform_14, window_bounds = array<i64: 1, 32>}, {pipeline_mode = #tpu.pipeline_mode<synchronous>, transform_indices = @transform_15, window_bounds = array<i64: 32, 128>}, {pipeline_mode = #tpu.pipeline_mode<synchronous>, transform_indices = @transform_16, window_bounds = array<i64: 1, 128>}, {transform_indices = @transform_17, window_bounds = array<i64: 1, 1, 128>}]} {
    %c0 = arith.constant 0 : index
    %c0_0 = arith.constant 0 : index
    %c0_1 = arith.constant 0 : index
    %0 = vector.load %arg2[%c0, %c0_0, %c0_1] : memref<1x8x32xf32, #tpu.memory_space<vmem>>, vector<1x8x32xf32>
    %1 = vector.shape_cast %0 : vector<1x8x32xf32> to vector<8x32xf32>
    %c0_2 = arith.constant 0 : index
    %c0_3 = arith.constant 0 : index
    %2 = vector.load %arg3[%c0_2, %c0_3] : memref<1x32xf32, #tpu.memory_space<vmem>>, vector<1x32xf32>
    %c0_4 = arith.constant 0 : index
    %c0_5 = arith.constant 0 : index
    %3 = vector.load %arg4[%c0_4, %c0_5] : memref<1x32xf32, #tpu.memory_space<vmem>>, vector<1x32xf32>
    %cst = arith.constant dense<0.000000e+00> : vector<8xf32>
    %4 = vector.multi_reduction <add>, %1, %cst [1] : vector<8x32xf32> to vector<8xf32>
    %5 = vector.shape_cast %4 : vector<8xf32> to vector<8x1xf32>
    %cst_6 = arith.constant 3.200000e+01 : f32
    %6 = vector.broadcast %cst_6 : f32 to vector<8x1xf32>
    %7 = arith.divf %5, %6 : vector<8x1xf32>
    %8 = vector.broadcast %7 : vector<8x1xf32> to vector<8x32xf32>
    %9 = arith.subf %1, %8 : vector<8x32xf32>
    %10 = arith.mulf %9, %9 : vector<8x32xf32>
    %cst_7 = arith.constant dense<0.000000e+00> : vector<8xf32>
    %11 = vector.multi_reduction <add>, %10, %cst_7 [1] : vector<8x32xf32> to vector<8xf32>
    %12 = vector.shape_cast %11 : vector<8xf32> to vector<8x1xf32>
    %cst_8 = arith.constant 3.200000e+01 : f32
    %13 = vector.broadcast %cst_8 : f32 to vector<8x1xf32>
    %14 = arith.divf %12, %13 : vector<8x1xf32>
    %15 = vector.broadcast %7 : vector<8x1xf32> to vector<8x32xf32>
    %16 = arith.subf %1, %15 : vector<8x32xf32>
    %cst_9 = arith.constant 9.99999996E-13 : f32
    %17 = vector.broadcast %cst_9 : f32 to vector<8x1xf32>
    %18 = arith.addf %14, %17 : vector<8x1xf32>
    %19 = math.rsqrt %18 : vector<8x1xf32>
    %20 = vector.broadcast %19 : vector<8x1xf32> to vector<8x32xf32>
    %21 = arith.mulf %16, %20 : vector<8x32xf32>
    %22 = vector.broadcast %2 : vector<1x32xf32> to vector<8x32xf32>
    %23 = arith.mulf %21, %22 : vector<8x32xf32>
    %24 = vector.broadcast %3 : vector<1x32xf32> to vector<8x32xf32>
    %25 = arith.addf %23, %24 : vector<8x32xf32>
    %26 = arith.index_cast %arg0 : i32 to index
    %27 = memref.load %arg1[%26] : memref<2xi32, #tpu.memory_space<smem>>
    %28 = tpu.iota {dimensions = array<i32: 1>} : vector<1x8xi32>
    %29 = vector.broadcast %27 : i32 to vector<1x8xi32>
    %30 = arith.cmpi slt, %28, %29 : vector<1x8xi32>
    %cst_10 = arith.constant 0.000000e+00 : f32
    %cst_11 = arith.constant -1.000000e+09 : f32
    %31 = vector.broadcast %cst_10 : f32 to vector<1x8xf32>
    %32 = vector.broadcast %cst_11 : f32 to vector<1x8xf32>
    %33 = arith.select %30, %31, %32 : vector<1x8xi1>, vector<1x8xf32>
    %34 = arith.truncf %25 : vector<8x32xf32> to vector<8x32xbf16>
    %c0_12 = arith.constant 0 : index
    %c0_13 = arith.constant 0 : index
    %35 = vector.load %arg5[%c0_12, %c0_13] : memref<32x96xbf16, #tpu.memory_space<vmem>>, vector<32x96xbf16>
    %cst_14 = arith.constant dense<0.000000e+00> : vector<8x96xf32>
    %36 = tpu.matmul %34, %35, %cst_14 {dimension_numbers = #tpu.dot_dimension_numbers<[1], [0], [0], [1], [0, 0, 1, 1], [], []>} : vector<8x32xbf16>, vector<32x96xbf16>, vector<8x96xf32> -> vector<8x96xf32>
    %37 = vector.extract_strided_slice %36 {offsets = [0, 0], sizes = [8, 32], strides = [1, 1]} : vector<8x96xf32> to vector<8x32xf32>
    %38 = arith.truncf %37 : vector<8x32xf32> to vector<8x32xbf16>
    %39 = vector.extract_strided_slice %36 {offsets = [0, 32], sizes = [8, 32], strides = [1, 1]} : vector<8x96xf32> to vector<8x32xf32>
    %40 = arith.truncf %39 : vector<8x32xf32> to vector<8x32xbf16>
    %41 = vector.extract_strided_slice %36 {offsets = [0, 64], sizes = [8, 32], strides = [1, 1]} : vector<8x96xf32> to vector<8x32xf32>
    %42 = arith.truncf %41 : vector<8x32xf32> to vector<8x32xbf16>
    %cst_15 = arith.constant dense<0.000000e+00> : vector<8x8xf32>
    %43 = tpu.matmul %38, %40, %cst_15 {dimension_numbers = #tpu.dot_dimension_numbers<[1], [1], [0], [0], [0, 0, 1, 0], [], []>} : vector<8x32xbf16>, vector<8x32xbf16>, vector<8x8xf32> -> vector<8x8xf32>
    %44 = vector.broadcast %33 : vector<1x8xf32> to vector<8x8xf32>
    %45 = arith.addf %43, %44 : vector<8x8xf32>
    %cst_16 = arith.constant dense<0xFF800000> : vector<8xf32>
    %46 = vector.multi_reduction <maximumf>, %45, %cst_16 [1] : vector<8x8xf32> to vector<8xf32>
    %47 = vector.shape_cast %46 : vector<8xf32> to vector<8x1xf32>
    %48 = vector.broadcast %47 : vector<8x1xf32> to vector<8x8xf32>
    %49 = arith.subf %45, %48 : vector<8x8xf32>
    %50 = math.exp %49 : vector<8x8xf32>
    %cst_17 = arith.constant dense<0.000000e+00> : vector<8xf32>
    %51 = vector.multi_reduction <add>, %50, %cst_17 [1] : vector<8x8xf32> to vector<8xf32>
    %52 = vector.shape_cast %51 : vector<8xf32> to vector<8x1xf32>
    %53 = tpu.reciprocal %52 {approx = true} : vector<8x1xf32> -> vector<8x1xf32>
    %54 = vector.broadcast %53 : vector<8x1xf32> to vector<8x8xf32>
    %55 = arith.mulf %50, %54 : vector<8x8xf32>
    %56 = arith.truncf %55 : vector<8x8xf32> to vector<8x8xbf16>
    %cst_18 = arith.constant dense<0.000000e+00> : vector<8x32xf32>
    %57 = tpu.matmul %56, %42, %cst_18 {dimension_numbers = #tpu.dot_dimension_numbers<[1], [0], [0], [1], [0, 0, 1, 1], [], []>} : vector<8x8xbf16>, vector<8x32xbf16>, vector<8x32xf32> -> vector<8x32xf32>
    %58 = arith.truncf %57 : vector<8x32xf32> to vector<8x32xbf16>
    %c0_19 = arith.constant 0 : index
    %c0_20 = arith.constant 0 : index
    %59 = vector.load %arg6[%c0_19, %c0_20] : memref<32x32xbf16, #tpu.memory_space<vmem>>, vector<32x32xbf16>
    %cst_21 = arith.constant dense<0.000000e+00> : vector<8x32xf32>
    %60 = tpu.matmul %58, %59, %cst_21 {dimension_numbers = #tpu.dot_dimension_numbers<[1], [0], [0], [1], [0, 0, 1, 1], [], []>} : vector<8x32xbf16>, vector<32x32xbf16>, vector<8x32xf32> -> vector<8x32xf32>
    %61 = arith.addf %25, %60 : vector<8x32xf32>
    %c0_22 = arith.constant 0 : index
    %c0_23 = arith.constant 0 : index
    %62 = vector.load %arg7[%c0_22, %c0_23] : memref<1x32xf32, #tpu.memory_space<vmem>>, vector<1x32xf32>
    %c0_24 = arith.constant 0 : index
    %c0_25 = arith.constant 0 : index
    %63 = vector.load %arg8[%c0_24, %c0_25] : memref<1x32xf32, #tpu.memory_space<vmem>>, vector<1x32xf32>
    %cst_26 = arith.constant dense<0.000000e+00> : vector<8xf32>
    %64 = vector.multi_reduction <add>, %61, %cst_26 [1] : vector<8x32xf32> to vector<8xf32>
    %65 = vector.shape_cast %64 : vector<8xf32> to vector<8x1xf32>
    %cst_27 = arith.constant 3.200000e+01 : f32
    %66 = vector.broadcast %cst_27 : f32 to vector<8x1xf32>
    %67 = arith.divf %65, %66 : vector<8x1xf32>
    %68 = vector.broadcast %67 : vector<8x1xf32> to vector<8x32xf32>
    %69 = arith.subf %61, %68 : vector<8x32xf32>
    %70 = arith.mulf %69, %69 : vector<8x32xf32>
    %cst_28 = arith.constant dense<0.000000e+00> : vector<8xf32>
    %71 = vector.multi_reduction <add>, %70, %cst_28 [1] : vector<8x32xf32> to vector<8xf32>
    %72 = vector.shape_cast %71 : vector<8xf32> to vector<8x1xf32>
    %cst_29 = arith.constant 3.200000e+01 : f32
    %73 = vector.broadcast %cst_29 : f32 to vector<8x1xf32>
    %74 = arith.divf %72, %73 : vector<8x1xf32>
    %75 = vector.broadcast %67 : vector<8x1xf32> to vector<8x32xf32>
    %76 = arith.subf %61, %75 : vector<8x32xf32>
    %cst_30 = arith.constant 9.99999996E-13 : f32
    %77 = vector.broadcast %cst_30 : f32 to vector<8x1xf32>
    %78 = arith.addf %74, %77 : vector<8x1xf32>
    %79 = math.rsqrt %78 : vector<8x1xf32>
    %80 = vector.broadcast %79 : vector<8x1xf32> to vector<8x32xf32>
    %81 = arith.mulf %76, %80 : vector<8x32xf32>
    %82 = vector.broadcast %62 : vector<1x32xf32> to vector<8x32xf32>
    %83 = arith.mulf %81, %82 : vector<8x32xf32>
    %84 = vector.broadcast %63 : vector<1x32xf32> to vector<8x32xf32>
    %85 = arith.addf %83, %84 : vector<8x32xf32>
    %86 = arith.truncf %85 : vector<8x32xf32> to vector<8x32xbf16>
    %c0_31 = arith.constant 0 : index
    %c0_32 = arith.constant 0 : index
    %87 = vector.load %arg9[%c0_31, %c0_32] : memref<32x128xbf16, #tpu.memory_space<vmem>>, vector<32x128xbf16>
    %cst_33 = arith.constant dense<0.000000e+00> : vector<8x128xf32>
    %88 = tpu.matmul %86, %87, %cst_33 {dimension_numbers = #tpu.dot_dimension_numbers<[1], [0], [0], [1], [0, 0, 1, 1], [], []>} : vector<8x32xbf16>, vector<32x128xbf16>, vector<8x128xf32> -> vector<8x128xf32>
    %c0_34 = arith.constant 0 : index
    %c0_35 = arith.constant 0 : index
    %89 = vector.load %arg10[%c0_34, %c0_35] : memref<1x128xf32, #tpu.memory_space<vmem>>, vector<1x128xf32>
    %90 = vector.broadcast %89 : vector<1x128xf32> to vector<8x128xf32>
    %91 = arith.addf %88, %90 : vector<8x128xf32>
    %92 = arith.mulf %91, %91 : vector<8x128xf32>
    %93 = arith.mulf %91, %92 : vector<8x128xf32>
    %cst_36 = arith.constant 4.471500e-02 : f32
    %94 = vector.broadcast %cst_36 : f32 to vector<8x128xf32>
    %95 = arith.mulf %94, %93 : vector<8x128xf32>
    %96 = arith.addf %91, %95 : vector<8x128xf32>
    %cst_37 = arith.constant 0.797884583 : f32
    %97 = vector.broadcast %cst_37 : f32 to vector<8x128xf32>
    %98 = arith.mulf %97, %96 : vector<8x128xf32>
    %99 = math.tanh %98 : vector<8x128xf32>
    %cst_38 = arith.constant 1.000000e+00 : f32
    %100 = vector.broadcast %cst_38 : f32 to vector<8x128xf32>
    %101 = arith.addf %100, %99 : vector<8x128xf32>
    %cst_39 = arith.constant 5.000000e-01 : f32
    %102 = vector.broadcast %cst_39 : f32 to vector<8x128xf32>
    %103 = arith.mulf %102, %101 : vector<8x128xf32>
    %104 = arith.mulf %91, %103 : vector<8x128xf32>
    %105 = arith.truncf %104 : vector<8x128xf32> to vector<8x128xbf16>
    %c0_40 = arith.constant 0 : index
    %c0_41 = arith.constant 0 : index
    %106 = vector.load %arg11[%c0_40, %c0_41] : memref<128x32xbf16, #tpu.memory_space<vmem>>, vector<128x32xbf16>
    %cst_42 = arith.constant dense<0.000000e+00> : vector<8x32xf32>
    %107 = tpu.matmul %105, %106, %cst_42 {dimension_numbers = #tpu.dot_dimension_numbers<[1], [0], [0], [1], [0, 0, 1, 1], [], []>} : vector<8x128xbf16>, vector<128x32xbf16>, vector<8x32xf32> -> vector<8x32xf32>
    %c0_43 = arith.constant 0 : index
    %c0_44 = arith.constant 0 : index
    %108 = vector.load %arg12[%c0_43, %c0_44] : memref<1x32xf32, #tpu.memory_space<vmem>>, vector<1x32xf32>
    %109 = vector.broadcast %108 : vector<1x32xf32> to vector<8x32xf32>
    %110 = arith.addf %107, %109 : vector<8x32xf32>
    %111 = arith.addf %85, %110 : vector<8x32xf32>
    %c0_45 = arith.constant 0 : index
    %c0_46 = arith.constant 0 : index
    %112 = vector.load %arg13[%c0_45, %c0_46] : memref<1x32xf32, #tpu.memory_space<vmem>>, vector<1x32xf32>
    %c0_47 = arith.constant 0 : index
    %c0_48 = arith.constant 0 : index
    %113 = vector.load %arg14[%c0_47, %c0_48] : memref<1x32xf32, #tpu.memory_space<vmem>>, vector<1x32xf32>
    %cst_49 = arith.constant dense<0.000000e+00> : vector<8xf32>
    %114 = vector.multi_reduction <add>, %111, %cst_49 [1] : vector<8x32xf32> to vector<8xf32>
    %115 = vector.shape_cast %114 : vector<8xf32> to vector<8x1xf32>
    %cst_50 = arith.constant 3.200000e+01 : f32
    %116 = vector.broadcast %cst_50 : f32 to vector<8x1xf32>
    %117 = arith.divf %115, %116 : vector<8x1xf32>
    %118 = vector.broadcast %117 : vector<8x1xf32> to vector<8x32xf32>
    %119 = arith.subf %111, %118 : vector<8x32xf32>
    %120 = arith.mulf %119, %119 : vector<8x32xf32>
    %cst_51 = arith.constant dense<0.000000e+00> : vector<8xf32>
    %121 = vector.multi_reduction <add>, %120, %cst_51 [1] : vector<8x32xf32> to vector<8xf32>
    %122 = vector.shape_cast %121 : vector<8xf32> to vector<8x1xf32>
    %cst_52 = arith.constant 3.200000e+01 : f32
    %123 = vector.broadcast %cst_52 : f32 to vector<8x1xf32>
    %124 = arith.divf %122, %123 : vector<8x1xf32>
    %125 = vector.broadcast %117 : vector<8x1xf32> to vector<8x32xf32>
    %126 = arith.subf %111, %125 : vector<8x32xf32>
    %cst_53 = arith.constant 9.99999996E-13 : f32
    %127 = vector.broadcast %cst_53 : f32 to vector<8x1xf32>
    %128 = arith.addf %124, %127 : vector<8x1xf32>
    %129 = math.rsqrt %128 : vector<8x1xf32>
    %130 = vector.broadcast %129 : vector<8x1xf32> to vector<8x32xf32>
    %131 = arith.mulf %126, %130 : vector<8x32xf32>
    %132 = vector.broadcast %112 : vector<1x32xf32> to vector<8x32xf32>
    %133 = arith.mulf %131, %132 : vector<8x32xf32>
    %134 = vector.broadcast %113 : vector<1x32xf32> to vector<8x32xf32>
    %135 = arith.addf %133, %134 : vector<8x32xf32>
    %136 = vector.extract_strided_slice %135 {offsets = [0, 0], sizes = [1, 32], strides = [1, 1]} : vector<8x32xf32> to vector<1x32xf32>
    %137 = arith.truncf %136 : vector<1x32xf32> to vector<1x32xbf16>
    %c0_54 = arith.constant 0 : index
    %c0_55 = arith.constant 0 : index
    %138 = vector.load %arg15[%c0_54, %c0_55] : memref<32x32xbf16, #tpu.memory_space<vmem>>, vector<32x32xbf16>
    %cst_56 = arith.constant dense<0.000000e+00> : vector<1x32xf32>
    %139 = tpu.matmul %137, %138, %cst_56 {dimension_numbers = #tpu.dot_dimension_numbers<[1], [0], [0], [1], [0, 0, 1, 1], [], []>} : vector<1x32xbf16>, vector<32x32xbf16>, vector<1x32xf32> -> vector<1x32xf32>
    %c0_57 = arith.constant 0 : index
    %c0_58 = arith.constant 0 : index
    %140 = vector.load %arg16[%c0_57, %c0_58] : memref<1x32xf32, #tpu.memory_space<vmem>>, vector<1x32xf32>
    %141 = arith.addf %139, %140 : vector<1x32xf32>
    %142 = math.tanh %141 : vector<1x32xf32>
    %143 = arith.truncf %142 : vector<1x32xf32> to vector<1x32xbf16>
    %c0_59 = arith.constant 0 : index
    %c0_60 = arith.constant 0 : index
    %144 = vector.load %arg17[%c0_59, %c0_60] : memref<32x128xbf16, #tpu.memory_space<vmem>>, vector<32x128xbf16>
    %cst_61 = arith.constant dense<0.000000e+00> : vector<1x128xf32>
    %145 = tpu.matmul %143, %144, %cst_61 {dimension_numbers = #tpu.dot_dimension_numbers<[1], [0], [0], [1], [0, 0, 1, 1], [], []>} : vector<1x32xbf16>, vector<32x128xbf16>, vector<1x128xf32> -> vector<1x128xf32>
    %c0_62 = arith.constant 0 : index
    %c0_63 = arith.constant 0 : index
    %146 = vector.load %arg18[%c0_62, %c0_63] : memref<1x128xf32, #tpu.memory_space<vmem>>, vector<1x128xf32>
    %147 = arith.addf %145, %146 : vector<1x128xf32>
    %c0_64 = arith.constant 0 : index
    %c0_65 = arith.constant 0 : index
    %c0_66 = arith.constant 0 : index
    %148 = vector.load %arg19[%c0_64, %c0_65, %c0_66] : memref<1x1x128xf32, #tpu.memory_space<vmem>>, vector<1x1x128xf32>
    %149 = vector.shape_cast %148 : vector<1x1x128xf32> to vector<1x128xf32>
    %150 = vector.shape_cast %147 : vector<1x128xf32> to vector<1x1x128xf32>
    tpu.vector_store %arg19[%c0_64, %c0_65, %c0_66], %150 {strides = array<i32>} : memref<1x1x128xf32, #tpu.memory_space<vmem>>, vector<1x1x128xf32>,
    return
  }
  func.func @transform_0(%arg0: i32, %arg1: memref<2xi32, #tpu.memory_space<smem>>) -> (i32, i32, i32) {
    %c0_i32 = arith.constant 0 : i32
    %c0_i32_0 = arith.constant 0 : i32
    %c0_i32_1 = arith.constant 0 : i32
    return %arg0, %c0_i32, %c0_i32_0 : i32, i32, i32
  }
  func.func @transform_1(%arg0: i32, %arg1: memref<2xi32, #tpu.memory_space<smem>>) -> (i32, i32) {
    %c0_i32 = arith.constant 0 : i32
    %c0_i32_0 = arith.constant 0 : i32
    %c0_i32_1 = arith.constant 0 : i32
    return %c0_i32, %c0_i32_0 : i32, i32
  }
  func.func @transform_2(%arg0: i32, %arg1: memref<2xi32, #tpu.memory_space<smem>>) -> (i32, i32) {
    %c0_i32 = arith.constant 0 : i32
    %c0_i32_0 = arith.constant 0 : i32
    %c0_i32_1 = arith.constant 0 : i32
    return %c0_i32, %c0_i32_0 : i32, i32
  }
  func.func @transform_3(%arg0: i32, %arg1: memref<2xi32, #tpu.memory_space<smem>>) -> (i32, i32) {
    %c0_i32 = arith.constant 0 : i32
    %c0_i32_0 = arith.constant 0 : i32
    %c0_i32_1 = arith.constant 0 : i32
    return %c0_i32, %c0_i32_0 : i32, i32
  }
  func.func @transform_4(%arg0: i32, %arg1: memref<2xi32, #tpu.memory_space<smem>>) -> (i32, i32) {
    %c0_i32 = arith.constant 0 : i32
    %c0_i32_0 = arith.constant 0 : i32
    %c0_i32_1 = arith.constant 0 : i32
    return %c0_i32, %c0_i32_0 : i32, i32
  }
  func.func @transform_5(%arg0: i32, %arg1: memref<2xi32, #tpu.memory_space<smem>>) -> (i32, i32) {
    %c0_i32 = arith.constant 0 : i32
    %c0_i32_0 = arith.constant 0 : i32
    %c0_i32_1 = arith.constant 0 : i32
    return %c0_i32, %c0_i32_0 : i32, i32
  }
  func.func @transform_6(%arg0: i32, %arg1: memref<2xi32, #tpu.memory_space<smem>>) -> (i32, i32) {
    %c0_i32 = arith.constant 0 : i32
    %c0_i32_0 = arith.constant 0 : i32
    %c0_i32_1 = arith.constant 0 : i32
    return %c0_i32, %c0_i32_0 : i32, i32
  }
  func.func @transform_7(%arg0: i32, %arg1: memref<2xi32, #tpu.memory_space<smem>>) -> (i32, i32) {
    %c0_i32 = arith.constant 0 : i32
    %c0_i32_0 = arith.constant 0 : i32
    %c0_i32_1 = arith.constant 0 : i32
    return %c0_i32, %c0_i32_0 : i32, i32
  }
  func.func @transform_8(%arg0: i32, %arg1: memref<2xi32, #tpu.memory_space<smem>>) -> (i32, i32) {
    %c0_i32 = arith.constant 0 : i32
    %c0_i32_0 = arith.constant 0 : i32
    %c0_i32_1 = arith.constant 0 : i32
    return %c0_i32, %c0_i32_0 : i32, i32
  }
  func.func @transform_9(%arg0: i32, %arg1: memref<2xi32, #tpu.memory_space<smem>>) -> (i32, i32) {
    %c0_i32 = arith.constant 0 : i32
    %c0_i32_0 = arith.constant 0 : i32
    %c0_i32_1 = arith.constant 0 : i32
    return %c0_i32, %c0_i32_0 : i32, i32
  }
  func.func @transform_10(%arg0: i32, %arg1: memref<2xi32, #tpu.memory_space<smem>>) -> (i32, i32) {
    %c0_i32 = arith.constant 0 : i32
    %c0_i32_0 = arith.constant 0 : i32
    %c0_i32_1 = arith.constant 0 : i32
    return %c0_i32, %c0_i32_0 : i32, i32
  }
  func.func @transform_11(%arg0: i32, %arg1: memref<2xi32, #tpu.memory_space<smem>>) -> (i32, i32) {
    %c0_i32 = arith.constant 0 : i32
    %c0_i32_0 = arith.constant 0 : i32
    %c0_i32_1 = arith.constant 0 : i32
    return %c0_i32, %c0_i32_0 : i32, i32
  }
  func.func @transform_12(%arg0: i32, %arg1: memref<2xi32, #tpu.memory_space<smem>>) -> (i32, i32) {
    %c0_i32 = arith.constant 0 : i32
    %c0_i32_0 = arith.constant 0 : i32
    %c0_i32_1 = arith.constant 0 : i32
    return %c0_i32, %c0_i32_0 : i32, i32
  }
  func.func @transform_13(%arg0: i32, %arg1: memref<2xi32, #tpu.memory_space<smem>>) -> (i32, i32) {
    %c0_i32 = arith.constant 0 : i32
    %c0_i32_0 = arith.constant 0 : i32
    %c0_i32_1 = arith.constant 0 : i32
    return %c0_i32, %c0_i32_0 : i32, i32
  }
  func.func @transform_14(%arg0: i32, %arg1: memref<2xi32, #tpu.memory_space<smem>>) -> (i32, i32) {
    %c0_i32 = arith.constant 0 : i32
    %c0_i32_0 = arith.constant 0 : i32
    %c0_i32_1 = arith.constant 0 : i32
    return %c0_i32, %c0_i32_0 : i32, i32
  }
  func.func @transform_15(%arg0: i32, %arg1: memref<2xi32, #tpu.memory_space<smem>>) -> (i32, i32) {
    %c0_i32 = arith.constant 0 : i32
    %c0_i32_0 = arith.constant 0 : i32
    %c0_i32_1 = arith.constant 0 : i32
    return %c0_i32, %c0_i32_0 : i32, i32
  }
  func.func @transform_16(%arg0: i32, %arg1: memref<2xi32, #tpu.memory_space<smem>>) -> (i32, i32) {
    %c0_i32 = arith.constant 0 : i32
    %c0_i32_0 = arith.constant 0 : i32
    %c0_i32_1 = arith.constant 0 : i32
    return %c0_i32, %c0_i32_0 : i32, i32
  }
  func.func @transform_17(%arg0: i32, %arg1: memref<2xi32, #tpu.memory_space<smem>>) -> (i32, i32, i32) {
    %c0_i32 = arith.constant 0 : i32
    %c0_i32_0 = arith.constant 0 : i32
    %c0_i32_1 = arith.constant 0 : i32
    return %arg0, %c0_i32, %c0_i32_0 : i32, i32, i32
  }
}

module attributes {stable_mosaic.version = 11 : i64} {
  func.func @_fused_bert_kernel(%arg0: i32, %arg1: memref<2xi32, #tpu.memory_space<smem>>, %arg2: memref<1x8x32xf32, #tpu.memory_space<vmem>>, %arg3: memref<1x32xf32, #tpu.memory_space<vmem>>, %arg4: memref<1x32xf32, #tpu.memory_space<vmem>>, %arg5: memref<32x96xbf16, #tpu.memory_space<vmem>>, %arg6: memref<32x32xbf16, #tpu.memory_space<vmem>>, %arg7: memref<1x32xf32, #tpu.memory_space<vmem>>, %arg8: memref<1x32xf32, #tpu.memory_space<vmem>>, %arg9: memref<32x128xbf16, #tpu.memory_space<vmem>>, %arg10: memref<1x128xf32, #tpu.memory_space<vmem>>, %arg11: memref<128x32xbf16, #tpu.memory_space<vmem>>, %arg12: memref<1x32xf32, #tpu.memory_space<vmem>>, %arg13: memref<1x32xf32, #tpu.memory_space<vmem>>, %arg14: memref<1x32xf32, #tpu.memory_space<vmem>>, %arg15: memref<32x32xbf16, #tpu.memory_space<vmem>>, %arg16: memref<1x32xf32, #tpu.memory_space<vmem>>, %arg17: memref<32x128xbf16, #tpu.memory_space<vmem>>, %arg18: memref<1x128xf32, #tpu.memory_space<vmem>>, %arg19: memref<1x1x128xf32, #tpu.memory_space<vmem>>) attributes {dimension_semantics = [#tpu.dimension_semantics<parallel>], iteration_bounds = array<i64: 2>, scalar_prefetch = 1 : i64, scratch_operands = 0 : i64, tpu.core_type = #tpu.core_type<tc>, window_params = [{transform_indices = @transform_0, window_bounds = array<i64: 1, 8, 32>}, {pipeline_mode = #tpu.pipeline_mode<synchronous>, transform_indices = @transform_1, window_bounds = array<i64: 1, 32>}, {pipeline_mode = #tpu.pipeline_mode<synchronous>, transform_indices = @transform_2, window_bounds = array<i64: 1, 32>}, {pipeline_mode = #tpu.pipeline_mode<synchronous>, transform_indices = @transform_3, window_bounds = array<i64: 32, 96>}, {pipeline_mode = #tpu.pipeline_mode<synchronous>, transform_indices = @transform_4, window_bounds = array<i64: 32, 32>}, {pipeline_mode = #tpu.pipeline_mode<synchronous>, transform_indices = @transform_5, window_bounds = array<i64: 1, 32>}, {pipeline_mode = #tpu.pipeline_mode<synchronous>, transform_indices = @transform_6, window_bounds = array<i64: 1, 32>}, {pipeline_mode = #tpu.pipeline_mode<synchronous>, transform_indices = @transform_7, window_bounds = array<i64: 32, 128>}, {pipeline_mode = #tpu.pipeline_mode<synchronous>, transform_indices = @transform_8, window_bounds = array<i64: 1, 128>}, {pipeline_mode = #tpu.pipeline_mode<synchronous>, transform_indices = @transform_9, window_bounds = array<i64: 128, 32>}, {pipeline_mode = #tpu.pipeline_mode<synchronous>, transform_indices = @transform_10, window_bounds = array<i64: 1, 32>}, {pipeline_mode = #tpu.pipeline_mode<synchronous>, transform_indices = @transform_11, window_bounds = array<i64: 1, 32>}, {pipeline_mode = #tpu.pipeline_mode<synchronous>, transform_indices = @transform_12, window_bounds = array<i64: 1, 32>}, {pipeline_mode = #tpu.pipeline_mode<synchronous>, transform_indices = @transform_13, window_bounds = array<i64: 32, 32>}, {pipeline_mode = #tpu.pipeline_mode<synchronous>, transform_indices = @transform_14, window_bounds = array<i64: 1, 32>}, {pipeline_mode = #tpu.pipeline_mode<synchronous>, transform_indices = @transform_15, window_bounds = array<i64: 32, 128>}, {pipeline_mode = #tpu.pipeline_mode<synchronous>, transform_indices = @transform_16, window_bounds = array<i64: 1, 128>}, {transform_indices = @transform_17, window_bounds = array<i64: 1, 1, 128>}]} {
    %c0 = arith.constant 0 : index
    %c0_0 = arith.constant 0 : index
    %c0_1 = arith.constant 0 : index
    %0 = vector.load %arg2[%c0, %c0_0, %c0_1] : memref<1x8x32xf32, #tpu.memory_space<vmem>>, vector<1x8x32xf32>
    %1 = vector.shape_cast %0 : vector<1x8x32xf32> to vector<8x32xf32>
    %c0_2 = arith.constant 0 : index
    %c0_3 = arith.constant 0 : index
    %2 = vector.load %arg3[%c0_2, %c0_3] : memref<1x32xf32, #tpu.memory_space<vmem>>, vector<1x32xf32>
    %c0_4 = arith.constant 0 : index
    %c0_5 = arith.constant 0 : index
    %3 = vector.load %arg4[%c0_4, %c0_5] : memref<1x32xf32, #tpu.memory_space<vmem>>, vector<1x32xf32>
    %cst = arith.constant dense<0.000000e+00> : vector<8xf32>
    %4 = vector.multi_reduction <add>, %1, %cst [1] : vector<8x32xf32> to vector<8xf32>
    %5 = vector.shape_cast %4 : vector<8xf32> to vector<8x1xf32>
    %cst_6 = arith.constant 3.200000e+01 : f32
    %6 = vector.broadcast %cst_6 : f32 to vector<8x1xf32>
    %7 = arith.divf %5, %6 : vector<8x1xf32>
    %8 = vector.broadcast %7 : vector<8x1xf32> to vector<8x32xf32>
    %9 = arith.subf %1, %8 : vector<8x32xf32>
    %10 = arith.mulf %9, %9 : vector<8x32xf32>
    %cst_7 = arith.constant dense<0.000000e+00> : vector<8xf32>
    %11 = vector.multi_reduction <add>, %10, %cst_7 [1] : vector<8x32xf32> to vector<8xf32>
    %12 = vector.shape_cast %11 : vector<8xf32> to vector<8x1xf32>
    %cst_8 = arith.constant 3.200000e+01 : f32
    %13 = vector.broadcast %cst_8 : f32 to vector<8x1xf32>
    %14 = arith.divf %12, %13 : vector<8x1xf32>
    %15 = vector.broadcast %7 : vector<8x1xf32> to vector<8x32xf32>
    %16 = arith.subf %1, %15 : vector<8x32xf32>
    %cst_9 = arith.constant 9.99999996E-13 : f32
    %17 = vector.broadcast %cst_9 : f32 to vector<8x1xf32>
    %18 = arith.addf %14, %17 : vector<8x1xf32>
    %19 = math.rsqrt %18 : vector<8x1xf32>
    %20 = vector.broadcast %19 : vector<8x1xf32> to vector<8x32xf32>
    %21 = arith.mulf %16, %20 : vector<8x32xf32>
    %22 = vector.broadcast %2 : vector<1x32xf32> to vector<8x32xf32>
    %23 = arith.mulf %21, %22 : vector<8x32xf32>
    %24 = vector.broadcast %3 : vector<1x32xf32> to vector<8x32xf32>
    %25 = arith.addf %23, %24 : vector<8x32xf32>
    %26 = arith.index_cast %arg0 : i32 to index
    %27 = memref.load %arg1[%26] : memref<2xi32, #tpu.memory_space<smem>>
    %28 = tpu.iota {dimensions = array<i32: 1>} : vector<1x8xi32>
    %29 = vector.broadcast %27 : i32 to vector<1x8xi32>
    %30 = arith.cmpi slt, %28, %29 : vector<1x8xi32>
    %cst_10 = arith.constant 0.000000e+00 : f32
    %cst_11 = arith.constant -1.000000e+09 : f32
    %31 = vector.broadcast %cst_10 : f32 to vector<1x8xf32>
    %32 = vector.broadcast %cst_11 : f32 to vector<1x8xf32>
    %33 = arith.select %30, %31, %32 : vector<1x8xi1>, vector<1x8xf32>
    %34 = arith.truncf %25 : vector<8x32xf32> to vector<8x32xbf16>
    %c0_12 = arith.constant 0 : index
    %c0_13 = arith.constant 0 : index
    %35 = vector.load %arg5[%c0_12, %c0_13] : memref<32x96xbf16, #tpu.memory_space<vmem>>, vector<32x96xbf16>
    %cst_14 = arith.constant dense<0.000000e+00> : vector<8x96xf32>
    %36 = tpu.matmul %34, %35, %cst_14 {dimension_numbers = #tpu.dot_dimension_numbers<[1], [0], [0], [1], [0, 0, 1, 1], [], []>} : vector<8x32xbf16>, vector<32x96xbf16>, vector<8x96xf32> -> vector<8x96xf32>
    %37 = vector.extract_strided_slice %36 {offsets = [0, 0], sizes = [8, 32], strides = [1, 1]} : vector<8x96xf32> to vector<8x32xf32>
    %38 = arith.truncf %37 : vector<8x32xf32> to vector<8x32xbf16>
    %39 = vector.extract_strided_slice %36 {offsets = [0, 32], sizes = [8, 32], strides = [1, 1]} : vector<8x96xf32> to vector<8x32xf32>
    %40 = arith.truncf %39 : vector<8x32xf32> to vector<8x32xbf16>
    %41 = vector.extract_strided_slice %36 {offsets = [0, 64], sizes = [8, 32], strides = [1, 1]} : vector<8x96xf32> to vector<8x32xf32>
    %42 = arith.truncf %41 : vector<8x32xf32> to vector<8x32xbf16>
    %cst_15 = arith.constant dense<0.000000e+00> : vector<8x8xf32>
    %43 = tpu.matmul %38, %40, %cst_15 {dimension_numbers = #tpu.dot_dimension_numbers<[1], [1], [0], [0], [0, 0, 1, 0], [], []>} : vector<8x32xbf16>, vector<8x32xbf16>, vector<8x8xf32> -> vector<8x8xf32>
    %44 = vector.broadcast %33 : vector<1x8xf32> to vector<8x8xf32>
    %45 = arith.addf %43, %44 : vector<8x8xf32>
    %cst_16 = arith.constant dense<0xFF800000> : vector<8xf32>
    %46 = vector.multi_reduction <maximumf>, %45, %cst_16 [1] : vector<8x8xf32> to vector<8xf32>
    %47 = vector.shape_cast %46 : vector<8xf32> to vector<8x1xf32>
    %48 = vector.broadcast %47 : vector<8x1xf32> to vector<8x8xf32>
    %49 = arith.subf %45, %48 : vector<8x8xf32>
    %50 = math.exp %49 : vector<8x8xf32>
    %cst_17 = arith.constant dense<0.000000e+00> : vector<8xf32>
    %51 = vector.multi_reduction <add>, %50, %cst_17 [1] : vector<8x8xf32> to vector<8xf32>
    %52 = vector.shape_cast %51 : vector<8xf32> to vector<8x1xf32>
    %53 = tpu.reciprocal %52 {approx = true} : vector<8x1xf32> -> vector<8x1xf32>
    %54 = vector.broadcast %53 : vector<8x1xf32> to vector<8x8xf32>
    %55 = arith.mulf %50, %54 : vector<8x8xf32>
    %56 = arith.truncf %55 : vector<8x8xf32> to vector<8x8xbf16>
    %cst_18 = arith.constant dense<0.000000e+00> : vector<8x32xf32>
    %57 = tpu.matmul %56, %42, %cst_18 {dimension_numbers = #tpu.dot_dimension_numbers<[1], [0], [0], [1], [0, 0, 1, 1], [], []>} : vector<8x8xbf16>, vector<8x32xbf16>, vector<8x32xf32> -> vector<8x32xf32>
    %58 = arith.truncf %57 : vector<8x32xf32> to vector<8x32xbf16>
    %c0_19 = arith.constant 0 : index
    %c0_20 = arith.constant 0 : index
    %59 = vector.load %arg6[%c0_19, %c0_20] : memref<32x32xbf16, #tpu.memory_space<vmem>>, vector<32x32xbf16>
    %cst_21 = arith.constant dense<0.000000e+00> : vector<8x32xf32>
    %60 = tpu.matmul %58, %59, %cst_21 {dimension_numbers = #tpu.dot_dimension_numbers<[1], [0], [0], [1], [0, 0, 1, 1], [], []>} : vector<8x32xbf16>, vector<32x32xbf16>, vector<8x32xf32> -> vector<8x32xf32>
    %61 = arith.addf %25, %60 : vector<8x32xf32>
    %c0_22 = arith.constant 0 : index
    %c0_23 = arith.constant 0 : index
    %62 = vector.load %arg7[%c0_22, %c0_23] : memref<1x32xf32, #tpu.memory_space<vmem>>, vector<1x32xf32>
    %c0_24 = arith.constant 0 : index
    %c0_25 = arith.constant 0 : index
    %63 = vector.load %arg8[%c0_24, %c0_25] : memref<1x32xf32, #tpu.memory_space<vmem>>, vector<1x32xf32>
    %cst_26 = arith.constant dense<0.000000e+00> : vector<8xf32>
    %64 = vector.multi_reduction <add>, %61, %cst_26 [1] : vector<8x32xf32> to vector<8xf32>
    %65 = vector.shape_cast %64 : vector<8xf32> to vector<8x1xf32>
    %cst_27 = arith.constant 3.200000e+01 : f32
    %66 = vector.broadcast %cst_27 : f32 to vector<8x1xf32>
    %67 = arith.divf %65, %66 : vector<8x1xf32>
    %68 = vector.broadcast %67 : vector<8x1xf32> to vector<8x32xf32>
    %69 = arith.subf %61, %68 : vector<8x32xf32>
    %70 = arith.mulf %69, %69 : vector<8x32xf32>
    %cst_28 = arith.constant dense<0.000000e+00> : vector<8xf32>
    %71 = vector.multi_reduction <add>, %70, %cst_28 [1] : vector<8x32xf32> to vector<8xf32>
    %72 = vector.shape_cast %71 : vector<8xf32> to vector<8x1xf32>
    %cst_29 = arith.constant 3.200000e+01 : f32
    %73 = vector.broadcast %cst_29 : f32 to vector<8x1xf32>
    %74 = arith.divf %72, %73 : vector<8x1xf32>
    %75 = vector.broadcast %67 : vector<8x1xf32> to vector<8x32xf32>
    %76 = arith.subf %61, %75 : vector<8x32xf32>
    %cst_30 = arith.constant 9.99999996E-13 : f32
    %77 = vector.broadcast %cst_30 : f32 to vector<8x1xf32>
    %78 = arith.addf %74, %77 : vector<8x1xf32>
    %79 = math.rsqrt %78 : vector<8x1xf32>
    %80 = vector.broadcast %79 : vector<8x1xf32> to vector<8x32xf32>
    %81 = arith.mulf %76, %80 : vector<8x32xf32>
    %82 = vector.broadcast %62 : vector<1x32xf32> to vector<8x32xf32>
    %83 = arith.mulf %81, %82 : vector<8x32xf32>
    %84 = vector.broadcast %63 : vector<1x32xf32> to vector<8x32xf32>
    %85 = arith.addf %83, %84 : vector<8x32xf32>
    %86 = arith.truncf %85 : vector<8x32xf32> to vector<8x32xbf16>
    %c0_31 = arith.constant 0 : index
    %c0_32 = arith.constant 0 : index
    %87 = vector.load %arg9[%c0_31, %c0_32] : memref<32x128xbf16, #tpu.memory_space<vmem>>, vector<32x128xbf16>
    %cst_33 = arith.constant dense<0.000000e+00> : vector<8x128xf32>
    %88 = tpu.matmul %86, %87, %cst_33 {dimension_numbers = #tpu.dot_dimension_numbers<[1], [0], [0], [1], [0, 0, 1, 1], [], []>} : vector<8x32xbf16>, vector<32x128xbf16>, vector<8x128xf32> -> vector<8x128xf32>
    %c0_34 = arith.constant 0 : index
    %c0_35 = arith.constant 0 : index
    %89 = vector.load %arg10[%c0_34, %c0_35] : memref<1x128xf32, #tpu.memory_space<vmem>>, vector<1x128xf32>
    %90 = vector.broadcast %89 : vector<1x128xf32> to vector<8x128xf32>
    %91 = arith.addf %88, %90 : vector<8x128xf32>
    %92 = arith.mulf %91, %91 : vector<8x128xf32>
    %93 = arith.mulf %91, %92 : vector<8x128xf32>
    %cst_36 = arith.constant 4.471500e-02 : f32
    %94 = vector.broadcast %cst_36 : f32 to vector<8x128xf32>
    %95 = arith.mulf %94, %93 : vector<8x128xf32>
    %96 = arith.addf %91, %95 : vector<8x128xf32>
    %cst_37 = arith.constant 0.797884583 : f32
    %97 = vector.broadcast %cst_37 : f32 to vector<8x128xf32>
    %98 = arith.mulf %97, %96 : vector<8x128xf32>
    %99 = math.tanh %98 : vector<8x128xf32>
    %cst_38 = arith.constant 1.000000e+00 : f32
    %100 = vector.broadcast %cst_38 : f32 to vector<8x128xf32>
    %101 = arith.addf %100, %99 : vector<8x128xf32>
    %cst_39 = arith.constant 5.000000e-01 : f32
    %102 = vector.broadcast %cst_39 : f32 to vector<8x128xf32>
    %103 = arith.mulf %102, %101 : vector<8x128xf32>
    %104 = arith.mulf %91, %103 : vector<8x128xf32>
    %105 = arith.truncf %104 : vector<8x128xf32> to vector<8x128xbf16>
    %c0_40 = arith.constant 0 : index
    %c0_41 = arith.constant 0 : index
    %106 = vector.load %arg11[%c0_40, %c0_41] : memref<128x32xbf16, #tpu.memory_space<vmem>>, vector<128x32xbf16>
    %cst_42 = arith.constant dense<0.000000e+00> : vector<8x32xf32>
    %107 = tpu.matmul %105, %106, %cst_42 {dimension_numbers = #tpu.dot_dimension_numbers<[1], [0], [0], [1], [0, 0, 1, 1], [], []>} : vector<8x128xbf16>, vector<128x32xbf16>, vector<8x32xf32> -> vector<8x32xf32>
    %c0_43 = arith.constant 0 : index
    %c0_44 = arith.constant 0 : index
    %108 = vector.load %arg12[%c0_43, %c0_44] : memref<1x32xf32, #tpu.memory_space<vmem>>, vector<1x32xf32>
    %109 = vector.broadcast %108 : vector<1x32xf32> to vector<8x32xf32>
    %110 = arith.addf %107, %109 : vector<8x32xf32>
    %111 = arith.addf %85, %110 : vector<8x32xf32>
    %c0_45 = arith.constant 0 : index
    %c0_46 = arith.constant 0 : index
    %112 = vector.load %arg13[%c0_45, %c0_46] : memref<1x32xf32, #tpu.memory_space<vmem>>, vector<1x32xf32>
    %c0_47 = arith.constant 0 : index
    %c0_48 = arith.constant 0 : index
    %113 = vector.load %arg14[%c0_47, %c0_48] : memref<1x32xf32, #tpu.memory_space<vmem>>, vector<1x32xf32>
    %cst_49 = arith.constant dense<0.000000e+00> : vector<8xf32>
    %114 = vector.multi_reduction <add>, %111, %cst_49 [1] : vector<8x32xf32> to vector<8xf32>
    %115 = vector.shape_cast %114 : vector<8xf32> to vector<8x1xf32>
    %cst_50 = arith.constant 3.200000e+01 : f32
    %116 = vector.broadcast %cst_50 : f32 to vector<8x1xf32>
    %117 = arith.divf %115, %116 : vector<8x1xf32>
    %118 = vector.broadcast %117 : vector<8x1xf32> to vector<8x32xf32>
    %119 = arith.subf %111, %118 : vector<8x32xf32>
    %120 = arith.mulf %119, %119 : vector<8x32xf32>
    %cst_51 = arith.constant dense<0.000000e+00> : vector<8xf32>
    %121 = vector.multi_reduction <add>, %120, %cst_51 [1] : vector<8x32xf32> to vector<8xf32>
    %122 = vector.shape_cast %121 : vector<8xf32> to vector<8x1xf32>
    %cst_52 = arith.constant 3.200000e+01 : f32
    %123 = vector.broadcast %cst_52 : f32 to vector<8x1xf32>
    %124 = arith.divf %122, %123 : vector<8x1xf32>
    %125 = vector.broadcast %117 : vector<8x1xf32> to vector<8x32xf32>
    %126 = arith.subf %111, %125 : vector<8x32xf32>
    %cst_53 = arith.constant 9.99999996E-13 : f32
    %127 = vector.broadcast %cst_53 : f32 to vector<8x1xf32>
    %128 = arith.addf %124, %127 : vector<8x1xf32>
    %129 = math.rsqrt %128 : vector<8x1xf32>
    %130 = vector.broadcast %129 : vector<8x1xf32> to vector<8x32xf32>
    %131 = arith.mulf %126, %130 : vector<8x32xf32>
    %132 = vector.broadcast %112 : vector<1x32xf32> to vector<8x32xf32>
    %133 = arith.mulf %131, %132 : vector<8x32xf32>
    %134 = vector.broadcast %113 : vector<1x32xf32> to vector<8x32xf32>
    %135 = arith.addf %133, %134 : vector<8x32xf32>
    %136 = vector.extract_strided_slice %135 {offsets = [0, 0], sizes = [1, 32], strides = [1, 1]} : vector<8x32xf32> to vector<1x32xf32>
    %137 = arith.truncf %136 : vector<1x32xf32> to vector<1x32xbf16>
    %c0_54 = arith.constant 0 : index
    %c0_55 = arith.constant 0 : index
    %138 = vector.load %arg15[%c0_54, %c0_55] : memref<32x32xbf16, #tpu.memory_space<vmem>>, vector<32x32xbf16>
    %cst_56 = arith.constant dense<0.000000e+00> : vector<1x32xf32>
    %139 = tpu.matmul %137, %138, %cst_56 {dimension_numbers = #tpu.dot_dimension_numbers<[1], [0], [0], [1], [0, 0, 1, 1], [], []>} : vector<1x32xbf16>, vector<32x32xbf16>, vector<1x32xf32> -> vector<1x32xf32>
    %c0_57 = arith.constant 0 : index
    %c0_58 = arith.constant 0 : index
    %140 = vector.load %arg16[%c0_57, %c0_58] : memref<1x32xf32, #tpu.memory_space<vmem>>, vector<1x32xf32>
    %141 = arith.addf %139, %140 : vector<1x32xf32>
    %142 = math.tanh %141 : vector<1x32xf32>
    %143 = arith.truncf %142 : vector<1x32xf32> to vector<1x32xbf16>
    %c0_59 = arith.constant 0 : index
    %c0_60 = arith.constant 0 : index
    %144 = vector.load %arg17[%c0_59, %c0_60] : memref<32x128xbf16, #tpu.memory_space<vmem>>, vector<32x128xbf16>
    %cst_61 = arith.constant dense<0.000000e+00> : vector<1x128xf32>
    %145 = tpu.matmul %143, %144, %cst_61 {dimension_numbers = #tpu.dot_dimension_numbers<[1], [0], [0], [1], [0, 0, 1, 1], [], []>} : vector<1x32xbf16>, vector<32x128xbf16>, vector<1x128xf32> -> vector<1x128xf32>
    %c0_62 = arith.constant 0 : index
    %c0_63 = arith.constant 0 : index
    %146 = vector.load %arg18[%c0_62, %c0_63] : memref<1x128xf32, #tpu.memory_space<vmem>>, vector<1x128xf32>
    %147 = arith.addf %145, %146 : vector<1x128xf32>
    %c0_64 = arith.constant 0 : index
    %c0_65 = arith.constant 0 : index
    %c0_66 = arith.constant 0 : index
    %148 = vector.load %arg19[%c0_64, %c0_65, %c0_66] : memref<1x1x128xf32, #tpu.memory_space<vmem>>, vector<1x1x128xf32>
    %149 = vector.shape_cast %148 : vector<1x1x128xf32> to vector<1x128xf32>
    %150 = vector.shape_cast %147 : vector<1x128xf32> to vector<1x1x128xf32>
    tpu.vector_store %arg19[%c0_64, %c0_65, %c0_66], %150 {strides = array<i32>} : memref<1x1x128xf32, #tpu.memory_space<vmem>>, vector<1x1x128xf32>,
    return
  }
  func.func @transform_0(%arg0: i32, %arg1: memref<2xi32, #tpu.memory_space<smem>>) -> (i32, i32, i32) {
    %c0_i32 = arith.constant 0 : i32
    %c0_i32_0 = arith.constant 0 : i32
    %c0_i32_1 = arith.constant 0 : i32
    return %arg0, %c0_i32, %c0_i32_0 : i32, i32, i32
  }
  func.func @transform_1(%arg0: i32, %arg1: memref<2xi32, #tpu.memory_space<smem>>) -> (i32, i32) {
    %c0_i32 = arith.constant 0 : i32
    %c0_i32_0 = arith.constant 0 : i32
    %c0_i32_1 = arith.constant 0 : i32
    return %c0_i32, %c0_i32_0 : i32, i32
  }
  func.func @transform_2(%arg0: i32, %arg1: memref<2xi32, #tpu.memory_space<smem>>) -> (i32, i32) {
    %c0_i32 = arith.constant 0 : i32
    %c0_i32_0 = arith.constant 0 : i32
    %c0_i32_1 = arith.constant 0 : i32
    return %c0_i32, %c0_i32_0 : i32, i32
  }
  func.func @transform_3(%arg0: i32, %arg1: memref<2xi32, #tpu.memory_space<smem>>) -> (i32, i32) {
    %c0_i32 = arith.constant 0 : i32
    %c0_i32_0 = arith.constant 0 : i32
    %c0_i32_1 = arith.constant 0 : i32
    return %c0_i32, %c0_i32_0 : i32, i32
  }
  func.func @transform_4(%arg0: i32, %arg1: memref<2xi32, #tpu.memory_space<smem>>) -> (i32, i32) {
    %c0_i32 = arith.constant 0 : i32
    %c0_i32_0 = arith.constant 0 : i32
    %c0_i32_1 = arith.constant 0 : i32
    return %c0_i32, %c0_i32_0 : i32, i32
  }
  func.func @transform_5(%arg0: i32, %arg1: memref<2xi32, #tpu.memory_space<smem>>) -> (i32, i32) {
    %c0_i32 = arith.constant 0 : i32
    %c0_i32_0 = arith.constant 0 : i32
    %c0_i32_1 = arith.constant 0 : i32
    return %c0_i32, %c0_i32_0 : i32, i32
  }
  func.func @transform_6(%arg0: i32, %arg1: memref<2xi32, #tpu.memory_space<smem>>) -> (i32, i32) {
    %c0_i32 = arith.constant 0 : i32
    %c0_i32_0 = arith.constant 0 : i32
    %c0_i32_1 = arith.constant 0 : i32
    return %c0_i32, %c0_i32_0 : i32, i32
  }
  func.func @transform_7(%arg0: i32, %arg1: memref<2xi32, #tpu.memory_space<smem>>) -> (i32, i32) {
    %c0_i32 = arith.constant 0 : i32
    %c0_i32_0 = arith.constant 0 : i32
    %c0_i32_1 = arith.constant 0 : i32
    return %c0_i32, %c0_i32_0 : i32, i32
  }
  func.func @transform_8(%arg0: i32, %arg1: memref<2xi32, #tpu.memory_space<smem>>) -> (i32, i32) {
    %c0_i32 = arith.constant 0 : i32
    %c0_i32_0 = arith.constant 0 : i32
    %c0_i32_1 = arith.constant 0 : i32
    return %c0_i32, %c0_i32_0 : i32, i32
  }
  func.func @transform_9(%arg0: i32, %arg1: memref<2xi32, #tpu.memory_space<smem>>) -> (i32, i32) {
    %c0_i32 = arith.constant 0 : i32
    %c0_i32_0 = arith.constant 0 : i32
    %c0_i32_1 = arith.constant 0 : i32
    return %c0_i32, %c0_i32_0 : i32, i32
  }
  func.func @transform_10(%arg0: i32, %arg1: memref<2xi32, #tpu.memory_space<smem>>) -> (i32, i32) {
    %c0_i32 = arith.constant 0 : i32
    %c0_i32_0 = arith.constant 0 : i32
    %c0_i32_1 = arith.constant 0 : i32
    return %c0_i32, %c0_i32_0 : i32, i32
  }
  func.func @transform_11(%arg0: i32, %arg1: memref<2xi32, #tpu.memory_space<smem>>) -> (i32, i32) {
    %c0_i32 = arith.constant 0 : i32
    %c0_i32_0 = arith.constant 0 : i32
    %c0_i32_1 = arith.constant 0 : i32
    return %c0_i32, %c0_i32_0 : i32, i32
  }
  func.func @transform_12(%arg0: i32, %arg1: memref<2xi32, #tpu.memory_space<smem>>) -> (i32, i32) {
    %c0_i32 = arith.constant 0 : i32
    %c0_i32_0 = arith.constant 0 : i32
    %c0_i32_1 = arith.constant 0 : i32
    return %c0_i32, %c0_i32_0 : i32, i32
  }
  func.func @transform_13(%arg0: i32, %arg1: memref<2xi32, #tpu.memory_space<smem>>) -> (i32, i32) {
    %c0_i32 = arith.constant 0 : i32
    %c0_i32_0 = arith.constant 0 : i32
    %c0_i32_1 = arith.constant 0 : i32
    return %c0_i32, %c0_i32_0 : i32, i32
  }
  func.func @transform_14(%arg0: i32, %arg1: memref<2xi32, #tpu.memory_space<smem>>) -> (i32, i32) {
    %c0_i32 = arith.constant 0 : i32
    %c0_i32_0 = arith.constant 0 : i32
    %c0_i32_1 = arith.constant 0 : i32
    return %c0_i32, %c0_i32_0 : i32, i32
  }
  func.func @transform_15(%arg0: i32, %arg1: memref<2xi32, #tpu.memory_space<smem>>) -> (i32, i32) {
    %c0_i32 = arith.constant 0 : i32
    %c0_i32_0 = arith.constant 0 : i32
    %c0_i32_1 = arith.constant 0 : i32
    return %c0_i32, %c0_i32_0 : i32, i32
  }
  func.func @transform_16(%arg0: i32, %arg1: memref<2xi32, #tpu.memory_space<smem>>) -> (i32, i32) {
    %c0_i32 = arith.constant 0 : i32
    %c0_i32_0 = arith.constant 0 : i32
    %c0_i32_1 = arith.constant 0 : i32
    return %c0_i32, %c0_i32_0 : i32, i32
  }
  func.func @transform_17(%arg0: i32, %arg1: memref<2xi32, #tpu.memory_space<smem>>) -> (i32, i32, i32) {
    %c0_i32 = arith.constant 0 : i32
    %c0_i32_0 = arith.constant 0 : i32
    %c0_i32_1 = arith.constant 0 : i32
    return %arg0, %c0_i32, %c0_i32_0 : i32, i32, i32
  }
}

</mosaic_0001>

<llo_original>
// kernel: bert_classifier_forward.1
$region0: #{bert_classifier_forward.1}
  #allocation0 [shape = 'u32[]', space=smem, size = 0x4, offset = 0x4, fixed_abs, tag = 'smem constant byte address 0x4 - core index']
  #allocation1 [shape = 'u32[72,128]{1,0:T(1,128)}', space=vmem, size = 0x9000, scoped, tag = 'internal scratch']
  #allocation2 [shape = 's32[1]{0}', space=sflag, size = 0x4, scoped, tag = 'scoped memory for bert_classifier_forward.1']
  #allocation3 [shape = 'u8[512]{0}', space=smem, size = 0x200, scoped, tag = 'prefetched SMEM operand 0']
  %s0 = inlined_call_operand.vmem [shape: s32[2], index: 0, kind: input, shape index: {}]
  %s1 = inlined_call_operand.vmem [shape: f32[2,8,32], index: 1, kind: input, shape index: {}]
  %s2 = inlined_call_operand.vmem [shape: f32[1,32], index: 2, kind: input, shape index: {}, may-alias: {2,6,12}]
  %s3 = inlined_call_operand.vmem [shape: f32[1,32], index: 3, kind: input, shape index: {}, may-alias: {3,7,11,13,15}]
  %s4 = inlined_call_operand.vmem [shape: bf16[32,96], index: 4, kind: input, shape index: {}]
  %s5 = inlined_call_operand.vmem [shape: bf16[32,32], index: 5, kind: input, shape index: {}]
  %s6 = inlined_call_operand.vmem [shape: f32[1,32], index: 6, kind: input, shape index: {}, may-alias: {2,6,12}]
  %s7 = inlined_call_operand.vmem [shape: f32[1,32], index: 7, kind: input, shape index: {}, may-alias: {3,7,11,13,15}]
  %s8 = inlined_call_operand.vmem [shape: bf16[32,128], index: 8, kind: input, shape index: {}]
  %s9 = inlined_call_operand.vmem [shape: f32[1,128], index: 9, kind: input, shape index: {}, may-alias: {9,17}]
  %s10 = inlined_call_operand.vmem [shape: bf16[128,32], index: 10, kind: input, shape index: {}]
  %s11 = inlined_call_operand.vmem [shape: f32[1,32], index: 11, kind: input, shape index: {}, may-alias: {3,7,11,13,15}]
  %s12 = inlined_call_operand.vmem [shape: f32[1,32], index: 12, kind: input, shape index: {}, may-alias: {2,6,12}]
  %s13 = inlined_call_operand.vmem [shape: f32[1,32], index: 13, kind: input, shape index: {}, may-alias: {3,7,11,13,15}]
  %s14 = inlined_call_operand.vmem [shape: bf16[32,32], index: 14, kind: input, shape index: {}]
  %s15 = inlined_call_operand.vmem [shape: f32[1,32], index: 15, kind: input, shape index: {}, may-alias: {3,7,11,13,15}]
  %s16 = inlined_call_operand.vmem [shape: bf16[32,128], index: 16, kind: input, shape index: {}]
  %s17 = inlined_call_operand.vmem [shape: f32[1,128], index: 17, kind: input, shape index: {}, may-alias: {9,17}]
  %s18 = inlined_call_operand.hbm [shape: f32[2,1,128], index: 18, kind: output, shape index: {}]
  %s19 = sld [smem:[#allocation0]]
  $region101: #{bert_classifier_forward.1} parent=0
    _
  %s21 = ssub.s32 1, %s19
  %s22 = scalar_select 0, %s21, %s19
  %s24 = sshll.u32 %s0, 4
  %s25 = int_to_ptr.vmem [resolvable:$true] %s24
  %27 = dma.vmem_to_smem %s25, 16, [#allocation3], [#allocation2]
  %29 = dma.done [#allocation2], 16
  %30 = sfence
  $region1: #{bert_classifier_forward.1} parent=0
    #allocation4 [shape = 'u8[1024]{0}', space=vmem, size = 0x400, scoped, tag = 'output window, operand 0']
    #allocation5 [shape = 's32[2]{0}', space=sflag, size = 0x8, scoped, tag = 'scoped memory for bert_classifier_forward.1']
    %31 = vsyncpa [#allocation5], 0
    %s32 = scalar_lea.sflag [#allocation5], 1
    %33 = vsyncpa %s32, 0
    loop: start=0, step=1, limit=4
    $region2: #{bert_classifier_forward.1} parent=1 // loop_pre_header
      _
    $region3: #{bert_classifier_forward.1} parent=1 // loop_header
      %s35 = sphi 0, %s39
      %p36 = scmp.ge.s32.totalorder %s35, 4
      %s45 = sphi 0, %s47
      %s48 = sphi 0, %s45
      %s49 = sphi 0, %s48
      %s65 = sphi 0, %s49
      %s69 = sphi 0, %s69
      %s71 = sphi 0, %s69
      %s72 = sphi 0, %s71
      %s86 = sphi 0, %s72
      %s90 = sphi 0, %s90
      %s92 = sphi 0, %s90
      %s93 = sphi 0, %s92
      %s107 = sphi 0, %s93
      %s111 = sphi 0, %s111
      %s113 = sphi 0, %s111
      %s114 = sphi 0, %s113
      %s128 = sphi 0, %s114
      %s132 = sphi 0, %s132
      %s134 = sphi 0, %s132
      %s135 = sphi 0, %s134
      %s149 = sphi 0, %s135
      %s153 = sphi 0, %s153
      %s155 = sphi 0, %s153
      %s156 = sphi 0, %s155
      %s170 = sphi 0, %s156
      %s174 = sphi 0, %s174
      %s176 = sphi 0, %s174
      %s177 = sphi 0, %s176
      %s191 = sphi 0, %s177
      %s195 = sphi 0, %s195
      %s197 = sphi 0, %s195
      %s198 = sphi 0, %s197
      %s212 = sphi 0, %s198
      %s216 = sphi 0, %s216
      %s218 = sphi 0, %s216
      %s219 = sphi 0, %s218
      %s233 = sphi 0, %s219
      %s237 = sphi 0, %s237
      %s239 = sphi 0, %s237
      %s240 = sphi 0, %s239
      %s254 = sphi 0, %s240
      %s258 = sphi 0, %s258
      %s260 = sphi 0, %s258
      %s261 = sphi 0, %s260
      %s275 = sphi 0, %s261
      %s279 = sphi 0, %s279
      %s281 = sphi 0, %s279
      %s282 = sphi 0, %s281
      %s296 = sphi 0, %s282
      %s300 = sphi 0, %s300
      %s302 = sphi 0, %s300
      %s303 = sphi 0, %s302
      %s317 = sphi 0, %s303
      %s321 = sphi 0, %s321
      %s323 = sphi 0, %s321
      %s324 = sphi 0, %s323
      %s338 = sphi 0, %s324
      %s342 = sphi 0, %s342
      %s344 = sphi 0, %s342
      %s345 = sphi 0, %s344
      %s359 = sphi 0, %s345
      %s363 = sphi 0, %s363
      %s365 = sphi 0, %s363
      %s366 = sphi 0, %s365
      %s380 = sphi 0, %s366
      %s384 = sphi 0, %s384
      %s386 = sphi 0, %s384
      %s387 = sphi 0, %s386
      %s401 = sphi 0, %s387
      %s407 = sphi 0, %s409
      %s410 = sphi 0, %s407
      %s411 = sphi 0, %s410
      %s427 = sphi 0, %s411
    $region4: #{bert_classifier_forward.1} parent=1 // loop_header_branch
      %38 = sbr.rel (%p36) target = $region8
    $region5: #{bert_classifier_forward.1} parent=1 // loop_body
      %s40 = ssub.s32 %s35, 1
      %s41 = ssub.s32 %s35, 2
      %s42 = sadd.s32 %s35, 1
      %s43 = ssub.s32 %s35, %s42
      %p44 = scmp.eq.s32.totalorder %s43, 0
      %s46 = sadd.s32 %s45, 1
      %s47 = scalar_select %p44, %s45, %s46
      %p50 = pneg %p44
      %p51 = scmp.eq.s32.totalorder %s35, 1
      %p52 = por %p50, %p51
      %p53 = scmp.ne.s32.totalorder %s45, %s48
      %p54 = scmp.eq.s32.totalorder %s35, 0
      %p55 = por %p53, %p54
      %p56 = scmp.ne.s32.totalorder %s45, %s48
      %p57 = scmp.eq.s32.totalorder %s40, 1
      %p58 = por %p56, %p57
      %p59 = scmp.ne.s32.totalorder %s48, %s49
      %p60 = scmp.eq.s32.totalorder %s40, 0
      %p61 = por %p59, %p60
      %p62 = scmp.ne.s32.totalorder %s48, %s49
      %p63 = scmp.eq.s32.totalorder %s41, 1
      %p64 = por %p62, %p63
      %p66 = scmp.ne.s32.totalorder %s49, %s65
      %p67 = scmp.eq.s32.totalorder %s41, 0
      %p68 = por %p66, %p67
      %s70 = sadd.s32 %s69, 1
      %p73 = scmp.eq.s32.totalorder %s35, 1
      %p74 = scmp.ne.s32.totalorder %s69, %s71
      %p75 = scmp.eq.s32.totalorder %s35, 0
      %p76 = por %p74, %p75
      %p77 = scmp.ne.s32.totalorder %s69, %s71
      %p78 = scmp.eq.s32.totalorder %s40, 1
      %p79 = por %p77, %p78
      %p80 = scmp.ne.s32.totalorder %s71, %s72
      %p81 = scmp.eq.s32.totalorder %s40, 0
      %p82 = por %p80, %p81
      %p83 = scmp.ne.s32.totalorder %s71, %s72
      %p84 = scmp.eq.s32.totalorder %s41, 1
      %p85 = por %p83, %p84
      %p87 = scmp.ne.s32.totalorder %s72, %s86
      %p88 = scmp.eq.s32.totalorder %s41, 0
      %p89 = por %p87, %p88
      %s91 = sadd.s32 %s90, 1
      %p94 = scmp.eq.s32.totalorder %s35, 1
      %p95 = scmp.ne.s32.totalorder %s90, %s92
      %p96 = scmp.eq.s32.totalorder %s35, 0
      %p97 = por %p95, %p96
      %p98 = scmp.ne.s32.totalorder %s90, %s92
      %p99 = scmp.eq.s32.totalorder %s40, 1
      %p100 = por %p98, %p99
      %p101 = scmp.ne.s32.totalorder %s92, %s93
      %p102 = scmp.eq.s32.totalorder %s40, 0
      %p103 = por %p101, %p102
      %p104 = scmp.ne.s32.totalorder %s92, %s93
      %p105 = scmp.eq.s32.totalorder %s41, 1
      %p106 = por %p104, %p105
      %p108 = scmp.ne.s32.totalorder %s93, %s107
      %p109 = scmp.eq.s32.totalorder %s41, 0
      %p110 = por %p108, %p109
      %s112 = sadd.s32 %s111, 1
      %p115 = scmp.eq.s32.totalorder %s35, 1
      %p116 = scmp.ne.s32.totalorder %s111, %s113
      %p117 = scmp.eq.s32.totalorder %s35, 0
      %p118 = por %p116, %p117
      %p119 = scmp.ne.s32.totalorder %s111, %s113
      %p120 = scmp.eq.s32.totalorder %s40, 1
      %p121 = por %p119, %p120
      %p122 = scmp.ne.s32.totalorder %s113, %s114
      %p123 = scmp.eq.s32.totalorder %s40, 0
      %p124 = por %p122, %p123
      %p125 = scmp.ne.s32.totalorder %s113, %s114
      %p126 = scmp.eq.s32.totalorder %s41, 1
      %p127 = por %p125, %p126
      %p129 = scmp.ne.s32.totalorder %s114, %s128
      %p130 = scmp.eq.s32.totalorder %s41, 0
      %p131 = por %p129, %p130
      %s133 = sadd.s32 %s132, 1
      %p136 = scmp.eq.s32.totalorder %s35, 1
      %p137 = scmp.ne.s32.totalorder %s132, %s134
      %p138 = scmp.eq.s32.totalorder %s35, 0
      %p139 = por %p137, %p138
      %p140 = scmp.ne.s32.totalorder %s132, %s134
      %p141 = scmp.eq.s32.totalorder %s40, 1
      %p142 = por %p140, %p141
      %p143 = scmp.ne.s32.totalorder %s134, %s135
      %p144 = scmp.eq.s32.totalorder %s40, 0
      %p145 = por %p143, %p144
      %p146 = scmp.ne.s32.totalorder %s134, %s135
      %p147 = scmp.eq.s32.totalorder %s41, 1
      %p148 = por %p146, %p147
      %p150 = scmp.ne.s32.totalorder %s135, %s149
      %p151 = scmp.eq.s32.totalorder %s41, 0
      %p152 = por %p150, %p151
      %s154 = sadd.s32 %s153, 1
      %p157 = scmp.eq.s32.totalorder %s35, 1
      %p158 = scmp.ne.s32.totalorder %s153, %s155
      %p159 = scmp.eq.s32.totalorder %s35, 0
      %p160 = por %p158, %p159
      %p161 = scmp.ne.s32.totalorder %s153, %s155
      %p162 = scmp.eq.s32.totalorder %s40, 1
      %p163 = por %p161, %p162
      %p164 = scmp.ne.s32.totalorder %s155, %s156
      %p165 = scmp.eq.s32.totalorder %s40, 0
      %p166 = por %p164, %p165
      %p167 = scmp.ne.s32.totalorder %s155, %s156
      %p168 = scmp.eq.s32.totalorder %s41, 1
      %p169 = por %p167, %p168
      %p171 = scmp.ne.s32.totalorder %s156, %s170
      %p172 = scmp.eq.s32.totalorder %s41, 0
      %p173 = por %p171, %p172
      %s175 = sadd.s32 %s174, 1
      %p178 = scmp.eq.s32.totalorder %s35, 1
      %p179 = scmp.ne.s32.totalorder %s174, %s176
      %p180 = scmp.eq.s32.totalorder %s35, 0
      %p181 = por %p179, %p180
      %p182 = scmp.ne.s32.totalorder %s174, %s176
      %p183 = scmp.eq.s32.totalorder %s40, 1
      %p184 = por %p182, %p183
      %p185 = scmp.ne.s32.totalorder %s176, %s177
      %p186 = scmp.eq.s32.totalorder %s40, 0
      %p187 = por %p185, %p186
      %p188 = scmp.ne.s32.totalorder %s176, %s177
      %p189 = scmp.eq.s32.totalorder %s41, 1
      %p190 = por %p188, %p189
      %p192 = scmp.ne.s32.totalorder %s177, %s191
      %p193 = scmp.eq.s32.totalorder %s41, 0
      %p194 = por %p192, %p193
      %s196 = sadd.s32 %s195, 1
      %p199 = scmp.eq.s32.totalorder %s35, 1
      %p200 = scmp.ne.s32.totalorder %s195, %s197
      %p201 = scmp.eq.s32.totalorder %s35, 0
      %p202 = por %p200, %p201
      %p203 = scmp.ne.s32.totalorder %s195, %s197
      %p204 = scmp.eq.s32.totalorder %s40, 1
      %p205 = por %p203, %p204
      %p206 = scmp.ne.s32.totalorder %s197, %s198
      %p207 = scmp.eq.s32.totalorder %s40, 0
      %p208 = por %p206, %p207
      %p209 = scmp.ne.s32.totalorder %s197, %s198
      %p210 = scmp.eq.s32.totalorder %s41, 1
      %p211 = por %p209, %p210
      %p213 = scmp.ne.s32.totalorder %s198, %s212
      %p214 = scmp.eq.s32.totalorder %s41, 0
      %p215 = por %p213, %p214
      %s217 = sadd.s32 %s216, 1
      %p220 = scmp.eq.s32.totalorder %s35, 1
      %p221 = scmp.ne.s32.totalorder %s216, %s218
      %p222 = scmp.eq.s32.totalorder %s35, 0
      %p223 = por %p221, %p222
      %p224 = scmp.ne.s32.totalorder %s216, %s218
      %p225 = scmp.eq.s32.totalorder %s40, 1
      %p226 = por %p224, %p225
      %p227 = scmp.ne.s32.totalorder %s218, %s219
      %p228 = scmp.eq.s32.totalorder %s40, 0
      %p229 = por %p227, %p228
      %p230 = scmp.ne.s32.totalorder %s218, %s219
      %p231 = scmp.eq.s32.totalorder %s41, 1
      %p232 = por %p230, %p231
      %p234 = scmp.ne.s32.totalorder %s219, %s233
      %p235 = scmp.eq.s32.totalorder %s41, 0
      %p236 = por %p234, %p235
      %s238 = sadd.s32 %s237, 1
      %p241 = scmp.eq.s32.totalorder %s35, 1
      %p242 = scmp.ne.s32.totalorder %s237, %s239
      %p243 = scmp.eq.s32.totalorder %s35, 0
      %p244 = por %p242, %p243
      %p245 = scmp.ne.s32.totalorder %s237, %s239
      %p246 = scmp.eq.s32.totalorder %s40, 1
      %p247 = por %p245, %p246
      %p248 = scmp.ne.s32.totalorder %s239, %s240
      %p249 = scmp.eq.s32.totalorder %s40, 0
      %p250 = por %p248, %p249
      %p251 = scmp.ne.s32.totalorder %s239, %s240
      %p252 = scmp.eq.s32.totalorder %s41, 1
      %p253 = por %p251, %p252
      %p255 = scmp.ne.s32.totalorder %s240, %s254
      %p256 = scmp.eq.s32.totalorder %s41, 0
      %p257 = por %p255, %p256
      %s259 = sadd.s32 %s258, 1
      %p262 = scmp.eq.s32.totalorder %s35, 1
      %p263 = scmp.ne.s32.totalorder %s258, %s260
      %p264 = scmp.eq.s32.totalorder %s35, 0
      %p265 = por %p263, %p264
      %p266 = scmp.ne.s32.totalorder %s258, %s260
      %p267 = scmp.eq.s32.totalorder %s40, 1
      %p268 = por %p266, %p267
      %p269 = scmp.ne.s32.totalorder %s260, %s261
      %p270 = scmp.eq.s32.totalorder %s40, 0
      %p271 = por %p269, %p270
      %p272 = scmp.ne.s32.totalorder %s260, %s261
      %p273 = scmp.eq.s32.totalorder %s41, 1
      %p274 = por %p272, %p273
      %p276 = scmp.ne.s32.totalorder %s261, %s275
      %p277 = scmp.eq.s32.totalorder %s41, 0
      %p278 = por %p276, %p277
      %s280 = sadd.s32 %s279, 1
      %p283 = scmp.eq.s32.totalorder %s35, 1
      %p284 = scmp.ne.s32.totalorder %s279, %s281
      %p285 = scmp.eq.s32.totalorder %s35, 0
      %p286 = por %p284, %p285
      %p287 = scmp.ne.s32.totalorder %s279, %s281
      %p288 = scmp.eq.s32.totalorder %s40, 1
      %p289 = por %p287, %p288
      %p290 = scmp.ne.s32.totalorder %s281, %s282
      %p291 = scmp.eq.s32.totalorder %s40, 0
      %p292 = por %p290, %p291
      %p293 = scmp.ne.s32.totalorder %s281, %s282
      %p294 = scmp.eq.s32.totalorder %s41, 1
      %p295 = por %p293, %p294
      %p297 = scmp.ne.s32.totalorder %s282, %s296
      %p298 = scmp.eq.s32.totalorder %s41, 0
      %p299 = por %p297, %p298
      %s301 = sadd.s32 %s300, 1
      %p304 = scmp.eq.s32.totalorder %s35, 1
      %p305 = scmp.ne.s32.totalorder %s300, %s302
      %p306 = scmp.eq.s32.totalorder %s35, 0
      %p307 = por %p305, %p306
      %p308 = scmp.ne.s32.totalorder %s300, %s302
      %p309 = scmp.eq.s32.totalorder %s40, 1
      %p310 = por %p308, %p309
      %p311 = scmp.ne.s32.totalorder %s302, %s303
      %p312 = scmp.eq.s32.totalorder %s40, 0
      %p313 = por %p311, %p312
      %p314 = scmp.ne.s32.totalorder %s302, %s303
      %p315 = scmp.eq.s32.totalorder %s41, 1
      %p316 = por %p314, %p315
      %p318 = scmp.ne.s32.totalorder %s303, %s317
      %p319 = scmp.eq.s32.totalorder %s41, 0
      %p320 = por %p318, %p319
      %s322 = sadd.s32 %s321, 1
      %p325 = scmp.eq.s32.totalorder %s35, 1
      %p326 = scmp.ne.s32.totalorder %s321, %s323
      %p327 = scmp.eq.s32.totalorder %s35, 0
      %p328 = por %p326, %p327
      %p329 = scmp.ne.s32.totalorder %s321, %s323
      %p330 = scmp.eq.s32.totalorder %s40, 1
      %p331 = por %p329, %p330
      %p332 = scmp.ne.s32.totalorder %s323, %s324
      %p333 = scmp.eq.s32.totalorder %s40, 0
      %p334 = por %p332, %p333
      %p335 = scmp.ne.s32.totalorder %s323, %s324
      %p336 = scmp.eq.s32.totalorder %s41, 1
      %p337 = por %p335, %p336
      %p339 = scmp.ne.s32.totalorder %s324, %s338
      %p340 = scmp.eq.s32.totalorder %s41, 0
      %p341 = por %p339, %p340
      %s343 = sadd.s32 %s342, 1
      %p346 = scmp.eq.s32.totalorder %s35, 1
      %p347 = scmp.ne.s32.totalorder %s342, %s344
      %p348 = scmp.eq.s32.totalorder %s35, 0
      %p349 = por %p347, %p348
      %p350 = scmp.ne.s32.totalorder %s342, %s344
      %p351 = scmp.eq.s32.totalorder %s40, 1
      %p352 = por %p350, %p351
      %p353 = scmp.ne.s32.totalorder %s344, %s345
      %p354 = scmp.eq.s32.totalorder %s40, 0
      %p355 = por %p353, %p354
      %p356 = scmp.ne.s32.totalorder %s344, %s345
      %p357 = scmp.eq.s32.totalorder %s41, 1
      %p358 = por %p356, %p357
      %p360 = scmp.ne.s32.totalorder %s345, %s359
      %p361 = scmp.eq.s32.totalorder %s41, 0
      %p362 = por %p360, %p361
      %s364 = sadd.s32 %s363, 1
      %p367 = scmp.eq.s32.totalorder %s35, 1
      %p368 = scmp.ne.s32.totalorder %s363, %s365
      %p369 = scmp.eq.s32.totalorder %s35, 0
      %p370 = por %p368, %p369
      %p371 = scmp.ne.s32.totalorder %s363, %s365
      %p372 = scmp.eq.s32.totalorder %s40, 1
      %p373 = por %p371, %p372
      %p374 = scmp.ne.s32.totalorder %s365, %s366
      %p375 = scmp.eq.s32.totalorder %s40, 0
      %p376 = por %p374, %p375
      %p377 = scmp.ne.s32.totalorder %s365, %s366
      %p378 = scmp.eq.s32.totalorder %s41, 1
      %p379 = por %p377, %p378
      %p381 = scmp.ne.s32.totalorder %s366, %s380
      %p382 = scmp.eq.s32.totalorder %s41, 0
      %p383 = por %p381, %p382
      %s385 = sadd.s32 %s384, 1
      %p388 = scmp.eq.s32.totalorder %s35, 1
      %p389 = scmp.ne.s32.totalorder %s384, %s386
      %p390 = scmp.eq.s32.totalorder %s35, 0
      %p391 = por %p389, %p390
      %p392 = scmp.ne.s32.totalorder %s384, %s386
      %p393 = scmp.eq.s32.totalorder %s40, 1
      %p394 = por %p392, %p393
      %p395 = scmp.ne.s32.totalorder %s386, %s387
      %p396 = scmp.eq.s32.totalorder %s40, 0
      %p397 = por %p395, %p396
      %p398 = scmp.ne.s32.totalorder %s386, %s387
      %p399 = scmp.eq.s32.totalorder %s41, 1
      %p400 = por %p398, %p399
      %p402 = scmp.ne.s32.totalorder %s387, %s401
      %p403 = scmp.eq.s32.totalorder %s41, 0
      %p404 = por %p402, %p403
      %s405 = ssub.s32 %s35, %s42
      %p406 = scmp.eq.s32.totalorder %s405, 0
      %s408 = sadd.s32 %s407, 1
      %s409 = scalar_select %p406, %s407, %s408
      %p412 = pneg %p406
      %p413 = scmp.eq.s32.totalorder %s35, 1
      %p414 = por %p412, %p413
      %p415 = scmp.ne.s32.totalorder %s407, %s410
      %p416 = scmp.eq.s32.totalorder %s35, 0
      %p417 = por %p415, %p416
      %p418 = scmp.ne.s32.totalorder %s407, %s410
      %p419 = scmp.eq.s32.totalorder %s40, 1
      %p420 = por %p418, %p419
      %p421 = scmp.ne.s32.totalorder %s410, %s411
      %p422 = scmp.eq.s32.totalorder %s40, 0
      %p423 = por %p421, %p422
      %p424 = scmp.ne.s32.totalorder %s410, %s411
      %p425 = scmp.eq.s32.totalorder %s41, 1
      %p426 = por %p424, %p425
      %p428 = scmp.ne.s32.totalorder %s411, %s427
      %p429 = scmp.eq.s32.totalorder %s41, 0
      %p430 = por %p428, %p429
      %p431 = scmp.le.s32.totalorder 1, %s35
      %p432 = scmp.lt.s32.totalorder %s35, 3
      %p433 = pnand %p431, %p432
      %p434 = pneg %p433
      // Predicated region
      $region9: #{bert_classifier_forward.1} parent=5 // pred_check
        _
      $region10: #{bert_classifier_forward.1} parent=5 // pred_check_branch
        %436 = sbr.rel (%p433) target = $region12
      $region11: #{bert_classifier_forward.1} parent=5 // pred_region
        %s437 = ssub.s32 %s35, 1
        // Predicated region
        $region13: #{bert_classifier_forward.1} parent=11 // pred_check
          %p438 = pneg %p82
        $region14: #{bert_classifier_forward.1} parent=11 // pred_check_branch
          %440 = sbr.rel (%p438) target = $region16
        $region15: #{bert_classifier_forward.1} parent=11 // pred_region
          _
        $region16: #{bert_classifier_forward.1} parent=11 // pred_fallthru
          _
        // Predicated region
        $region17: #{bert_classifier_forward.1} parent=11 // pred_check
          %p441 = pneg %p103
        $region18: #{bert_classifier_forward.1} parent=11 // pred_check_branch
          %443 = sbr.rel (%p441) target = $region20
        $region19: #{bert_classifier_forward.1} parent=11 // pred_region
          _
        $region20: #{bert_classifier_forward.1} parent=11 // pred_fallthru
          _
        // Predicated region
        $region21: #{bert_classifier_forward.1} parent=11 // pred_check
          %p444 = pneg %p124
        $region22: #{bert_classifier_forward.1} parent=11 // pred_check_branch
          %446 = sbr.rel (%p444) target = $region24
        $region23: #{bert_classifier_forward.1} parent=11 // pred_region
          _
        $region24: #{bert_classifier_forward.1} parent=11 // pred_fallthru
          _
        // Predicated region
        $region25: #{bert_classifier_forward.1} parent=11 // pred_check
          %p447 = pneg %p145
        $region26: #{bert_classifier_forward.1} parent=11 // pred_check_branch
          %449 = sbr.rel (%p447) target = $region28
        $region27: #{bert_classifier_forward.1} parent=11 // pred_region
          _
        $region28: #{bert_classifier_forward.1} parent=11 // pred_fallthru
          _
        // Predicated region
        $region29: #{bert_classifier_forward.1} parent=11 // pred_check
          %p450 = pneg %p166
        $region30: #{bert_classifier_forward.1} parent=11 // pred_check_branch
          %452 = sbr.rel (%p450) target = $region32
        $region31: #{bert_classifier_forward.1} parent=11 // pred_region
          _
        $region32: #{bert_classifier_forward.1} parent=11 // pred_fallthru
          _
        // Predicated region
        $region33: #{bert_classifier_forward.1} parent=11 // pred_check
          %p453 = pneg %p187
        $region34: #{bert_classifier_forward.1} parent=11 // pred_check_branch
          %455 = sbr.rel (%p453) target = $region36
        $region35: #{bert_classifier_forward.1} parent=11 // pred_region
          _
        $region36: #{bert_classifier_forward.1} parent=11 // pred_fallthru
          _
        // Predicated region
        $region37: #{bert_classifier_forward.1} parent=11 // pred_check
          %p456 = pneg %p208
        $region38: #{bert_classifier_forward.1} parent=11 // pred_check_branch
          %458 = sbr.rel (%p456) target = $region40
        $region39: #{bert_classifier_forward.1} parent=11 // pred_region
          _
        $region40: #{bert_classifier_forward.1} parent=11 // pred_fallthru
          _
        // Predicated region
        $region41: #{bert_classifier_forward.1} parent=11 // pred_check
          %p459 = pneg %p229
        $region42: #{bert_classifier_forward.1} parent=11 // pred_check_branch
          %461 = sbr.rel (%p459) target = $region44
        $region43: #{bert_classifier_forward.1} parent=11 // pred_region
          _
        $region44: #{bert_classifier_forward.1} parent=11 // pred_fallthru
          _
        // Predicated region
        $region45: #{bert_classifier_forward.1} parent=11 // pred_check
          %p462 = pneg %p250
        $region46: #{bert_classifier_forward.1} parent=11 // pred_check_branch
          %464 = sbr.rel (%p462) target = $region48
        $region47: #{bert_classifier_forward.1} parent=11 // pred_region
          _
        $region48: #{bert_classifier_forward.1} parent=11 // pred_fallthru
          _
        // Predicated region
        $region49: #{bert_classifier_forward.1} parent=11 // pred_check
          %p465 = pneg %p271
        $region50: #{bert_classifier_forward.1} parent=11 // pred_check_branch
          %467 = sbr.rel (%p465) target = $region52
        $region51: #{bert_classifier_forward.1} parent=11 // pred_region
          _
        $region52: #{bert_classifier_forward.1} parent=11 // pred_fallthru
          _
        // Predicated region
        $region53: #{bert_classifier_forward.1} parent=11 // pred_check
          %p468 = pneg %p292
        $region54: #{bert_classifier_forward.1} parent=11 // pred_check_branch
          %470 = sbr.rel (%p468) target = $region56
        $region55: #{bert_classifier_forward.1} parent=11 // pred_region
          _
        $region56: #{bert_classifier_forward.1} parent=11 // pred_fallthru
          _
        // Predicated region
        $region57: #{bert_classifier_forward.1} parent=11 // pred_check
          %p471 = pneg %p313
        $region58: #{bert_classifier_forward.1} parent=11 // pred_check_branch
          %473 = sbr.rel (%p471) target = $region60
        $region59: #{bert_classifier_forward.1} parent=11 // pred_region
          _
        $region60: #{bert_classifier_forward.1} parent=11 // pred_fallthru
          _
        // Predicated region
        $region61: #{bert_classifier_forward.1} parent=11 // pred_check
          %p474 = pneg %p334
        $region62: #{bert_classifier_forward.1} parent=11 // pred_check_branch
          %476 = sbr.rel (%p474) target = $region64
        $region63: #{bert_classifier_forward.1} parent=11 // pred_region
          _
        $region64: #{bert_classifier_forward.1} parent=11 // pred_fallthru
          _
        // Predicated region
        $region65: #{bert_classifier_forward.1} parent=11 // pred_check
          %p477 = pneg %p355
        $region66: #{bert_classifier_forward.1} parent=11 // pred_check_branch
          %479 = sbr.rel (%p477) target = $region68
        $region67: #{bert_classifier_forward.1} parent=11 // pred_region
          _
        $region68: #{bert_classifier_forward.1} parent=11 // pred_fallthru
          _
        // Predicated region
        $region69: #{bert_classifier_forward.1} parent=11 // pred_check
          %p480 = pneg %p376
        $region70: #{bert_classifier_forward.1} parent=11 // pred_check_branch
          %482 = sbr.rel (%p480) target = $region72
        $region71: #{bert_classifier_forward.1} parent=11 // pred_region
          _
        $region72: #{bert_classifier_forward.1} parent=11 // pred_fallthru
          _
        // Predicated region
        $region73: #{bert_classifier_forward.1} parent=11 // pred_check
          %p483 = pneg %p397
        $region74: #{bert_classifier_forward.1} parent=11 // pred_check_branch
          %485 = sbr.rel (%p483) target = $region76
        $region75: #{bert_classifier_forward.1} parent=11 // pred_region
          _
        $region76: #{bert_classifier_forward.1} parent=11 // pred_fallthru
          _
      $region12: #{bert_classifier_forward.1} parent=5 // pred_fallthru
        _
      %p486 = scmp.lt.s32.totalorder %s35, 2
      // Predicated region
      $region77: #{bert_classifier_forward.1} parent=5 // pred_check
        %p487 = pneg %p486
      $region78: #{bert_classifier_forward.1} parent=5 // pred_check_branch
        %489 = sbr.rel (%p487) target = $region80
      $region79: #{bert_classifier_forward.1} parent=5 // pred_region
        // Predicated region
        $region81: #{bert_classifier_forward.1} parent=79 // pred_check
          %p490 = pneg %p55
        $region82: #{bert_classifier_forward.1} parent=79 // pred_check_branch
          %492 = sbr.rel (%p490) target = $region84
        $region83: #{bert_classifier_forward.1} parent=79 // pred_region
          %p493 = scmp.lt.s32.totalorder %s35, 1
          %s494 = scalar_select %p493, %s35, 1
          %s495 = smul.addr %s494, 8
          %s496 = scalar_lea.vmem %s1, %s495
        $region84: #{bert_classifier_forward.1} parent=79 // pred_fallthru
          _
      $region80: #{bert_classifier_forward.1} parent=5 // pred_fallthru
        _
      %p497 = scmp.le.s32.totalorder 1, %s35
      %p498 = scmp.lt.s32.totalorder %s35, 3
      %p499 = pnand %p497, %p498
      %p500 = pneg %p499
      // Predicated region
      $region85: #{bert_classifier_forward.1} parent=5 // pred_check
        _
      $region86: #{bert_classifier_forward.1} parent=5 // pred_check_branch
        %502 = sbr.rel (%p499) target = $region88
      $region87: #{bert_classifier_forward.1} parent=5 // pred_region
        %s503 = ssub.s32 %s35, 1
        %p504 = scmp.lt.s32.totalorder %s40, 1
        %s505 = scalar_select %p504, %s40, 1
        %s506 = smul.addr %s505, 8
        %s507 = scalar_lea.vmem %s1, %s506
        %p508 = pneg %p61
        %p509 = pneg %p58
        %p510 = pneg %p82
        %p511 = pneg %p79
        %p512 = pneg %p103
        %p513 = pneg %p100
        %p514 = pneg %p124
        %p515 = pneg %p121
        %p516 = pneg %p145
        %p517 = pneg %p142
        %p518 = pneg %p166
        %p519 = pneg %p163
        %p520 = pneg %p187
        %p521 = pneg %p184
        %p522 = pneg %p208
        %p523 = pneg %p205
        %p524 = pneg %p229
        %p525 = pneg %p226
        %p526 = pneg %p250
        %p527 = pneg %p247
        %p528 = pneg %p271
        %p529 = pneg %p268
        %p530 = pneg %p292
        %p531 = pneg %p289
        %p532 = pneg %p313
        %p533 = pneg %p310
        %p534 = pneg %p334
        %p535 = pneg %p331
        %p536 = pneg %p355
        %p537 = pneg %p352
        %p538 = pneg %p376
        %p539 = pneg %p373
        %p540 = pneg %p397
        %p541 = pneg %p394
        %p542 = pneg %p423
        %p543 = pneg %p420
        %s544 = sand.u32 %s410, 1
        %s545 = scalar_lea.sflag [#allocation5], %s544
        %s546 = sand.u32 %s410, 1
        %s547 = scalar_lea.vmem [#allocation4], %s546
        %p548 = scmp.lt.s32.totalorder %s40, 1
        %s549 = scalar_select %p548, %s40, 1
        %s550 = smul.addr %s549, 8
        %s551 = scalar_lea.vmem %s1, %s550
        %v553 = vld [vmem:[%s551] sm:$0xff]
        %v554 = vld [vmem:[%s2] sm:$0x1]
        %v555 = vld [vmem:[%s3] sm:$0x1]
        %vm556 = vcmask 261120
        %v557 = vsel %vm556, %v553, 0.0
        %558 = vadd.xlane.f32.xlu0 %v557
        %v559 = vpop.xlane.xlu0 %558
        %v560 = vrcp.pop 32.0
        %v561 = vmul.f32 32.0, %v560
        %v562 = vsub.f32 1.0, %v561
        %v563 = vmul.f32 %v560, %v562
        %v564 = vadd.f32 %v560, %v563
        %vm565 = vweird.f32 %v560
        %v566 = vsel %vm565, %v560, %v564
        %v567 = vmul.f32 %v559, %v566
        %v568 = vsub.f32 %v553, %v567
        %v569 = vmul.f32 %v568, %v568
        %v570 = vsel %vm556, %v569, 0.0
        %571 = vadd.xlane.f32.xlu0 %v570
        %v572 = vpop.xlane.xlu0 %571
        %v573 = vmul.f32 %v572, %v566
        %v574 = vadd.f32 %v573, 1e-12
        %v575 = vrsqrt.pop %v574
        %v576 = vmul.f32 %v575, %v574
        %v577 = vmul.f32 %v576, %v575
        %v578 = vmul.f32 0.5, %v577
        %v579 = vsub.f32 1.5, %v578
        %v580 = vmul.f32 %v575, %v579
        %vm581 = vweird.f32 %v574
        %vm582 = vweird.f32 %v575
        %vm583 = vmor %vm581, %vm582
        %v584 = vsel %vm583, %v575, %v580
        %v585 = vmul.f32 %v568, %v584
        %v587 = vperm.slane %v554, 0
        %v589 = vmul.f32 %v585, %v587
        %v591 = vperm.slane %v555, 0
        %v593 = vadd.f32 %v589, %v591
        %s594 = sld [smem:[#allocation3 + %s40]]
        %v595 = vlaneseq
        %v596 = vand.u32 %v595, 127
        %v597 = vstv %s594
        %vm598 = vcmp.lt.s32.totalorder %v596, %v597
        %v599 = vsel %vm598, 0.0, -1e+09
        %v600 = vpack.c.bf16 %v593, %v593
        %v601 = vld [vmem:[%s4] sm:$0xf]
        %v602 = vld [vmem:[%s4 + $0x4] sm:$0xf]
        %v603 = vld [vmem:[%s4 + $0x8] sm:$0xf]
        %v604 = vld [vmem:[%s4 + $0xc] sm:$0xf]
        %v609 = vunpack.c.l.b16 %v601
        %v610 = vunpack.c.l.b16 %v602
        %v611 = vunpack.c.l.b16 %v603
        %v612 = vunpack.c.l.b16 %v604
        %v613 = vpack.c.b16 %v610, %v609
        %v614 = vpack.c.b16 %v612, %v611
        %v618 = vsel %vm556, %v600, 0
        %620 = vmatpush.bf16.msra.mxu0 0
        %621 = vmatpush.bf16.msra.mxu0 0
        %622 = vmatpush.bf16.msra.mxu0 0
        %623 = vmatpush.bf16.msra.mxu0 0
        %624 = vmatpush.bf16.msra.mxu0 0
        %625 = vmatpush.bf16.msra.mxu0 0
        %626 = vmatpush.bf16.msra.mxu0 %v614
        %627 = vmatpush.bf16.msra.mxu0 %v613
        %628 = vmatmul.bf16.gmra.mxu0 %v618
        %v629 = vpop.f32.mrf.mxu0
        %v630 = vadd.f32 0.0, %v629
        %v631 = vpop.f32.mrf.mxu0
        %632 = vdwg.mxu0
        %v633 = vpack.c.bf16 %v630, %v630
        %635 = vrot.lane.b32.xlu0 %v633, 96
        %v636 = vpop.permute.xlu0 %635
        %v638 = vsel %vm556, %v633, 0
        %v641 = vsel %vm556, %v636, 0
        %643 = vmatpush.bf16.xpose.msra.mxu0 0
        %644 = vmatpush.bf16.xpose.msra.mxu0 0
        %645 = vmatpush.bf16.xpose.msra.mxu0 0
        %646 = vmatpush.bf16.xpose.msra.mxu0 0
        %647 = vmatpush.bf16.xpose.msra.mxu0 0
        %648 = vmatpush.bf16.xpose.msra.mxu0 0
        %649 = vmatpush.bf16.xpose.msra.mxu0 0
        %650 = vmatpush.bf16.xpose.msra.mxu0 %v641
        %651 = vmatmul.bf16.gmra.mxu0 %v638
        %v652 = vpop.f32.mrf.mxu0
        %v653 = vadd.f32 %v599, %v652
        %v654 = vpop.f32.mrf.mxu0
        %655 = vdwg.mxu0
        %vm656 = vcmask 64512
        %v657 = vsel %vm656, %v653, -inf
        %658 = vmax.xlane.f32.xlu0 %v657
        %v659 = vpop.xlane.xlu0 %658
        %v660 = vsub.f32 %v653, %v659
        %v661 = vmul.f32 %v660, 1.442695
        %v662 = vpow.pop %v661
        %v663 = vsel %vm656, %v662, 0.0
        %664 = vadd.xlane.f32.xlu0 %v663
        %v665 = vpop.xlane.xlu0 %664
        %v666 = vrcp.pop %v665
        %v667 = vmul.f32 %v662, %v666
        %v668 = vpack.c.bf16 %v667, %v667
        %669 = vrot.lane.b32.xlu0 %v633, 64
        %v670 = vpop.permute.xlu0 %669
        %v672 = vsel %vm656, %v668, 0
        %vm674 = vcmask 1043456
        %v676 = vsel %vm674, %v670, 0
        %678 = vmatpush.bf16.msra.mxu0 0
        %679 = vmatpush.bf16.msra.mxu0 0
        %680 = vmatpush.bf16.msra.mxu0 0
        %681 = vmatpush.bf16.msra.mxu0 0
        %682 = vmatpush.bf16.msra.mxu0 0
        %683 = vmatpush.bf16.msra.mxu0 0
        %684 = vmatpush.bf16.msra.mxu0 0
        %685 = vmatpush.bf16.msra.mxu0 %v676
        %686 = vmatmul.bf16.gmra.mxu0 %v672
        %v687 = vpop.f32.mrf.mxu0
        %v688 = vadd.f32 0.0, %v687
        %v689 = vpop.f32.mrf.mxu0
        %690 = vdwg.mxu0
        %v691 = vpack.c.bf16 %v688, %v688
        %v692 = vld [vmem:[%s5] sm:$0xf]
        %v693 = vld [vmem:[%s5 + $0x4] sm:$0xf]
        %v694 = vld [vmem:[%s5 + $0x8] sm:$0xf]
        %v695 = vld [vmem:[%s5 + $0xc] sm:$0xf]
        %v700 = vunpack.c.l.b16 %v692
        %v701 = vunpack.c.l.b16 %v693
        %v702 = vunpack.c.l.b16 %v694
        %v703 = vunpack.c.l.b16 %v695
        %v704 = vpack.c.b16 %v701, %v700
        %v705 = vpack.c.b16 %v703, %v702
        %v709 = vsel %vm556, %v691, 0
        %711 = vmatpush.bf16.msra.mxu0 0
        %712 = vmatpush.bf16.msra.mxu0 0
        %713 = vmatpush.bf16.msra.mxu0 0
        %714 = vmatpush.bf16.msra.mxu0 0
        %715 = vmatpush.bf16.msra.mxu0 0
        %716 = vmatpush.bf16.msra.mxu0 0
        %717 = vmatpush.bf16.msra.mxu0 %v705
        %718 = vmatpush.bf16.msra.mxu0 %v704
        %719 = vmatmul.bf16.gmra.mxu0 %v709
        %v720 = vpop.f32.mrf.mxu0
        %v721 = vadd.f32 0.0, %v720
        %v722 = vpop.f32.mrf.mxu0
        %723 = vdwg.mxu0
        %v724 = vadd.f32 %v593, %v721
        %v725 = vld [vmem:[%s6] sm:$0x1]
        %v726 = vld [vmem:[%s7] sm:$0x1]
        %v727 = vsel %vm556, %v724, 0.0
        %728 = vadd.xlane.f32.xlu0 %v727
        %v729 = vpop.xlane.xlu0 %728
        %v730 = vmul.f32 %v729, %v566
        %v731 = vsub.f32 %v724, %v730
        %v732 = vmul.f32 %v731, %v731
        %v733 = vsel %vm556, %v732, 0.0
        %734 = vadd.xlane.f32.xlu0 %v733
        %v735 = vpop.xlane.xlu0 %734
        %v736 = vmul.f32 %v735, %v566
        %v737 = vadd.f32 %v736, 1e-12
        %v738 = vrsqrt.pop %v737
        %v739 = vmul.f32 %v738, %v737
        %v740 = vmul.f32 %v739, %v738
        %v741 = vmul.f32 0.5, %v740
        %v742 = vsub.f32 1.5, %v741
        %v743 = vmul.f32 %v738, %v742
        %vm744 = vweird.f32 %v737
        %vm745 = vweird.f32 %v738
        %vm746 = vmor %vm744, %vm745
        %v747 = vsel %vm746, %v738, %v743
        %v748 = vmul.f32 %v731, %v747
        %v750 = vperm.slane %v725, 0
        %v752 = vmul.f32 %v748, %v750
        %v754 = vperm.slane %v726, 0
        %v756 = vadd.f32 %v752, %v754
        %v757 = vpack.c.bf16 %v756, %v756
        %v758 = vld [vmem:[%s8] sm:$0xf]
        %v759 = vld [vmem:[%s8 + $0x4] sm:$0xf]
        %v760 = vld [vmem:[%s8 + $0x8] sm:$0xf]
        %v761 = vld [vmem:[%s8 + $0xc] sm:$0xf]
        %v762 = vld [vmem:[%s9] sm:$0x1]
        %v764 = vperm.slane %v762, 0
        %v770 = vunpack.c.l.b16 %v758
        %v771 = vunpack.c.l.b16 %v759
        %v772 = vunpack.c.l.b16 %v760
        %v773 = vunpack.c.l.b16 %v761
        %v774 = vpack.c.b16 %v771, %v770
        %v775 = vpack.c.b16 %v773, %v772
        %v779 = vsel %vm556, %v757, 0
        %781 = vmatpush.bf16.msra.mxu0 0
        %782 = vmatpush.bf16.msra.mxu0 0
        %783 = vmatpush.bf16.msra.mxu0 0
        %784 = vmatpush.bf16.msra.mxu0 0
        %785 = vmatpush.bf16.msra.mxu0 0
        %786 = vmatpush.bf16.msra.mxu0 0
        %787 = vmatpush.bf16.msra.mxu0 %v775
        %788 = vmatpush.bf16.msra.mxu0 %v774
        %789 = vmatmul.bf16.gmra.mxu0 %v779
        %v790 = vpop.f32.mrf.mxu0
        %v791 = vadd.f32 %v764, %v790
        %v792 = vpop.f32.mrf.mxu0
        %793 = vdwg.mxu0
        %v794 = vmul.f32 %v791, %v791
        %v795 = vmul.f32 %v791, %v794
        %v796 = vmul.f32 %v795, 0.044715
        %v797 = vadd.f32 %v791, %v796
        %v798 = vmul.f32 %v797, 0.7978846
        %v799 = vtanh.pop %v798
        %v800 = vadd.f32 %v799, 1.0
        %v801 = vmul.f32 %v800, 0.5
        %v802 = vmul.f32 %v791, %v801
        %v803 = vpack.c.bf16 %v802, %v802
        %v804 = vld [vmem:[%s10] sm:$0xf]
        %v805 = vld [vmem:[%s10 + $0x4] sm:$0xf]
        %v806 = vld [vmem:[%s10 + $0x8] sm:$0xf]
        %v807 = vld [vmem:[%s10 + $0xc] sm:$0xf]
        %v808 = vld [vmem:[%s10 + $0x10] sm:$0xf]
        %v809 = vld [vmem:[%s10 + $0x14] sm:$0xf]
        %v810 = vld [vmem:[%s10 + $0x18] sm:$0xf]
        %v811 = vld [vmem:[%s10 + $0x1c] sm:$0xf]
        %v812 = vld [vmem:[%s10 + $0x20] sm:$0xf]
        %v813 = vld [vmem:[%s10 + $0x24] sm:$0xf]
        %v814 = vld [vmem:[%s10 + $0x28] sm:$0xf]
        %v815 = vld [vmem:[%s10 + $0x2c] sm:$0xf]
        %v816 = vld [vmem:[%s10 + $0x30] sm:$0xf]
        %v817 = vld [vmem:[%s10 + $0x34] sm:$0xf]
        %v818 = vld [vmem:[%s10 + $0x38] sm:$0xf]
        %v819 = vld [vmem:[%s10 + $0x3c] sm:$0xf]
        %v820 = vld [vmem:[%s11] sm:$0x1]
        %v822 = vperm.slane %v820, 0
        %v840 = vunpack.c.l.b16 %v804
        %v841 = vunpack.c.l.b16 %v805
        %v842 = vunpack.c.l.b16 %v806
        %v843 = vunpack.c.l.b16 %v807
        %v844 = vunpack.c.l.b16 %v808
        %v845 = vunpack.c.l.b16 %v809
        %v846 = vunpack.c.l.b16 %v810
        %v847 = vunpack.c.l.b16 %v811
        %v848 = vunpack.c.l.b16 %v812
        %v849 = vunpack.c.l.b16 %v813
        %v850 = vunpack.c.l.b16 %v814
        %v851 = vunpack.c.l.b16 %v815
        %v852 = vunpack.c.l.b16 %v816
        %v853 = vunpack.c.l.b16 %v817
        %v854 = vunpack.c.l.b16 %v818
        %v855 = vunpack.c.l.b16 %v819
        %v856 = vpack.c.b16 %v841, %v840
        %v857 = vpack.c.b16 %v843, %v842
        %v858 = vpack.c.b16 %v845, %v844
        %v859 = vpack.c.b16 %v847, %v846
        %v860 = vpack.c.b16 %v849, %v848
        %v861 = vpack.c.b16 %v851, %v850
        %v862 = vpack.c.b16 %v853, %v852
        %v863 = vpack.c.b16 %v855, %v854
        %872 = vmatpush.bf16.msra.mxu0 %v863
        %873 = vmatpush.bf16.msra.mxu0 %v862
        %874 = vmatpush.bf16.msra.mxu0 %v861
        %875 = vmatpush.bf16.msra.mxu0 %v860
        %876 = vmatpush.bf16.msra.mxu0 %v859
        %877 = vmatpush.bf16.msra.mxu0 %v858
        %878 = vmatpush.bf16.msra.mxu0 %v857
        %879 = vmatpush.bf16.msra.mxu0 %v856
        %880 = vmatmul.bf16.gmra.mxu0 %v803
        %v881 = vpop.f32.mrf.mxu0
        %v882 = vadd.f32 %v822, %v881
        %v883 = vpop.f32.mrf.mxu0
        %884 = vdwg.mxu0
        %v885 = vadd.f32 %v756, %v882
        %v886 = vld [vmem:[%s12] sm:$0x1]
        %v887 = vld [vmem:[%s13] sm:$0x1]
        %v888 = vsel %vm556, %v885, 0.0
        %889 = vadd.xlane.f32.xlu0 %v888
        %v890 = vpop.xlane.xlu0 %889
        %v891 = vmul.f32 %v890, %v566
        %v892 = vsub.f32 %v885, %v891
        %v893 = vmul.f32 %v892, %v892
        %v894 = vsel %vm556, %v893, 0.0
        %895 = vadd.xlane.f32.xlu0 %v894
        %v896 = vpop.xlane.xlu0 %895
        %v897 = vmul.f32 %v896, %v566
        %v898 = vadd.f32 %v897, 1e-12
        %v899 = vrsqrt.pop %v898
        %v900 = vmul.f32 %v899, %v898
        %v901 = vmul.f32 %v900, %v899
        %v902 = vmul.f32 0.5, %v901
        %v903 = vsub.f32 1.5, %v902
        %v904 = vmul.f32 %v899, %v903
        %vm905 = vweird.f32 %v898
        %vm906 = vweird.f32 %v899
        %vm907 = vmor %vm905, %vm906
        %v908 = vsel %vm907, %v899, %v904
        %v909 = vmul.f32 %v892, %v908
        %v911 = vperm.slane %v886, 0
        %v913 = vmul.f32 %v909, %v911
        %v915 = vperm.slane %v887, 0
        %v917 = vadd.f32 %v913, %v915
        %v918 = vpack.c.bf16 %v917, %v917
        %v919 = vld [vmem:[%s14] sm:$0xf]
        %v920 = vld [vmem:[%s14 + $0x4] sm:$0xf]
        %v921 = vld [vmem:[%s14 + $0x8] sm:$0xf]
        %v922 = vld [vmem:[%s14 + $0xc] sm:$0xf]
        %v923 = vld [vmem:[%s15] sm:$0x1]
        %v928 = vunpack.c.l.b16 %v919
        %v929 = vunpack.c.l.b16 %v920
        %v930 = vunpack.c.l.b16 %v921
        %v931 = vunpack.c.l.b16 %v922
        %v932 = vpack.c.b16 %v929, %v928
        %v933 = vpack.c.b16 %v931, %v930
        %v937 = vsel %vm556, %v918, 0
        %939 = vmatpush.bf16.msra.mxu0 0
        %940 = vmatpush.bf16.msra.mxu0 0
        %941 = vmatpush.bf16.msra.mxu0 0
        %942 = vmatpush.bf16.msra.mxu0 0
        %943 = vmatpush.bf16.msra.mxu0 0
        %944 = vmatpush.bf16.msra.mxu0 0
        %945 = vmatpush.bf16.msra.mxu0 %v933
        %946 = vmatpush.bf16.msra.mxu0 %v932
        %947 = vmatmul.bf16.gmra.mxu0 %v937
        %v948 = vpop.f32.mrf.mxu0
        %v949 = vadd.f32 %v923, %v948
        %v950 = vpop.f32.mrf.mxu0
        %951 = vdwg.mxu0
        %v952 = vtanh.pop %v949
        %v953 = vpack.c.bf16 %v952, %v952
        %v954 = vld [vmem:[%s16] sm:$0xf]
        %v955 = vld [vmem:[%s16 + $0x4] sm:$0xf]
        %v956 = vld [vmem:[%s16 + $0x8] sm:$0xf]
        %v957 = vld [vmem:[%s16 + $0xc] sm:$0xf]
        %v958 = vld [vmem:[%s17] sm:$0x1]
        %v963 = vunpack.c.l.b16 %v954
        %v964 = vunpack.c.l.b16 %v955
        %v965 = vunpack.c.l.b16 %v956
        %v966 = vunpack.c.l.b16 %v957
        %v967 = vpack.c.b16 %v964, %v963
        %v968 = vpack.c.b16 %v966, %v965
        %v972 = vsel %vm556, %v953, 0
        %974 = vmatpush.bf16.msra.mxu0 0
        %975 = vmatpush.bf16.msra.mxu0 0
        %976 = vmatpush.bf16.msra.mxu0 0
        %977 = vmatpush.bf16.msra.mxu0 0
        %978 = vmatpush.bf16.msra.mxu0 0
        %979 = vmatpush.bf16.msra.mxu0 0
        %980 = vmatpush.bf16.msra.mxu0 %v968
        %981 = vmatpush.bf16.msra.mxu0 %v967
        %982 = vmatmul.bf16.gmra.mxu0 %v972
        %v983 = vpop.f32.mrf.mxu0
        %v984 = vadd.f32 %v958, %v983
        %v985 = vpop.f32.mrf.mxu0
        %986 = vdwg.mxu0
        %987 = vst [vmem:[%s547] sm:$0x1] %v984
        %s988 = sand.u32 %s410, 1
        %s989 = scalar_lea.sflag [#allocation5], %s988
        %s990 = sand.u32 %s410, 1
        %s991 = scalar_lea.vmem [#allocation4], %s990
        // Predicated region
        $region89: #{bert_classifier_forward.1} parent=87 // pred_check
          %p992 = pneg %p420
        $region90: #{bert_classifier_forward.1} parent=87 // pred_check_branch
          %994 = sbr.rel (%p992) target = $region92
        $region91: #{bert_classifier_forward.1} parent=87 // pred_region
          %996 = vsyncadd %s989, 0
          %s997 = scalar_lea.hbm %s18, %s40
          %s999 = sshll.u32 %s991, 4
          %s1000 = int_to_ptr.vmem [resolvable:$true] %s999
          %s1001 = sshll.u32 %s997, 4
          %s1002 = int_to_ptr.hbm [resolvable:$true] %s1001
          %1004 = dma.vmem_to_hbm [thread:$0]  %s1000, 16, %s1002, %s989
        $region92: #{bert_classifier_forward.1} parent=87 // pred_fallthru
          _
      $region88: #{bert_classifier_forward.1} parent=5 // pred_fallthru
        _
      %p1005 = scmp.le.s32.totalorder 2, %s35
      // Predicated region
      $region93: #{bert_classifier_forward.1} parent=5 // pred_check
        %p1006 = pneg %p1005
      $region94: #{bert_classifier_forward.1} parent=5 // pred_check_branch
        %1008 = sbr.rel (%p1006) target = $region96
      $region95: #{bert_classifier_forward.1} parent=5 // pred_region
        %s1009 = ssub.s32 %s35, 2
        // Predicated region
        $region97: #{bert_classifier_forward.1} parent=95 // pred_check
          %p1010 = pneg %p426
        $region98: #{bert_classifier_forward.1} parent=95 // pred_check_branch
          %1012 = sbr.rel (%p1010) target = $region100
        $region99: #{bert_classifier_forward.1} parent=95 // pred_region
          %s1013 = sand.u32 %s411, 1
          %s1014 = scalar_lea.sflag [#allocation5], %s1013
          %s1015 = sand.u32 %s411, 1
          %s1016 = scalar_lea.vmem [#allocation4], %s1015
          %1018 = dma.done %s1014, 16
        $region100: #{bert_classifier_forward.1} parent=95 // pred_fallthru
          _
      $region96: #{bert_classifier_forward.1} parent=5 // pred_fallthru
        _
    $region6: #{bert_classifier_forward.1} parent=1 // loop_footer
      %s39 = sadd.s32 1, %s35
    $region7: #{bert_classifier_forward.1} parent=1 // loop_footer_branch
      %34 = sbr.rel target = $region3
    $region8: #{bert_classifier_forward.1} parent=1 // loop_exit
      _
    %1019 = vsyncpa [#allocation5], 1
    %s1020 = scalar_lea.sflag [#allocation5], 1
    %1021 = vsyncpa %s1020, 1

// kernel: bert_classifier_forward.1
$region0: #{bert_classifier_forward.1}
  #allocation0 [shape = 'u32[]', space=smem, size = 0x4, offset = 0x4, fixed_abs, tag = 'smem constant byte address 0x4 - core index']
  #allocation1 [shape = 'u32[72,128]{1,0:T(1,128)}', space=vmem, size = 0x9000, scoped, tag = 'internal scratch']
  #allocation2 [shape = 's32[1]{0}', space=sflag, size = 0x4, scoped, tag = 'scoped memory for bert_classifier_forward.1']
  #allocation3 [shape = 'u8[512]{0}', space=smem, size = 0x200, scoped, tag = 'prefetched SMEM operand 0']
  %s0 = inlined_call_operand.vmem [shape: s32[2], index: 0, kind: input, shape index: {}]
  %s1 = inlined_call_operand.vmem [shape: f32[2,8,32], index: 1, kind: input, shape index: {}]
  %s2 = inlined_call_operand.vmem [shape: f32[1,32], index: 2, kind: input, shape index: {}, may-alias: {2,6,12}]
  %s3 = inlined_call_operand.vmem [shape: f32[1,32], index: 3, kind: input, shape index: {}, may-alias: {3,7,11,13,15}]
  %s4 = inlined_call_operand.vmem [shape: bf16[32,96], index: 4, kind: input, shape index: {}]
  %s5 = inlined_call_operand.vmem [shape: bf16[32,32], index: 5, kind: input, shape index: {}]
  %s6 = inlined_call_operand.vmem [shape: f32[1,32], index: 6, kind: input, shape index: {}, may-alias: {2,6,12}]
  %s7 = inlined_call_operand.vmem [shape: f32[1,32], index: 7, kind: input, shape index: {}, may-alias: {3,7,11,13,15}]
  %s8 = inlined_call_operand.vmem [shape: bf16[32,128], index: 8, kind: input, shape index: {}]
  %s9 = inlined_call_operand.vmem [shape: f32[1,128], index: 9, kind: input, shape index: {}, may-alias: {9,17}]
  %s10 = inlined_call_operand.vmem [shape: bf16[128,32], index: 10, kind: input, shape index: {}]
  %s11 = inlined_call_operand.vmem [shape: f32[1,32], index: 11, kind: input, shape index: {}, may-alias: {3,7,11,13,15}]
  %s12 = inlined_call_operand.vmem [shape: f32[1,32], index: 12, kind: input, shape index: {}, may-alias: {2,6,12}]
  %s13 = inlined_call_operand.vmem [shape: f32[1,32], index: 13, kind: input, shape index: {}, may-alias: {3,7,11,13,15}]
  %s14 = inlined_call_operand.vmem [shape: bf16[32,32], index: 14, kind: input, shape index: {}]
  %s15 = inlined_call_operand.vmem [shape: f32[1,32], index: 15, kind: input, shape index: {}, may-alias: {3,7,11,13,15}]
  %s16 = inlined_call_operand.vmem [shape: bf16[32,128], index: 16, kind: input, shape index: {}]
  %s17 = inlined_call_operand.vmem [shape: f32[1,128], index: 17, kind: input, shape index: {}, may-alias: {9,17}]
  %s18 = inlined_call_operand.hbm [shape: f32[2,1,128], index: 18, kind: output, shape index: {}]
  %s19 = sld [smem:[#allocation0]]
  $region101: #{bert_classifier_forward.1} parent=0
    _
  %s21 = ssub.s32 1, %s19
  %s22 = scalar_select 0, %s21, %s19
  %s24 = sshll.u32 %s0, 4
  %s25 = int_to_ptr.vmem [resolvable:$true] %s24
  %27 = dma.vmem_to_smem %s25, 16, [#allocation3], [#allocation2]
  %29 = dma.done [#allocation2], 16
  %30 = sfence
  $region1: #{bert_classifier_forward.1} parent=0
    #allocation4 [shape = 'u8[1024]{0}', space=vmem, size = 0x400, scoped, tag = 'output window, operand 0']
    #allocation5 [shape = 's32[2]{0}', space=sflag, size = 0x8, scoped, tag = 'scoped memory for bert_classifier_forward.1']
    %31 = vsyncpa [#allocation5], 0
    %s32 = scalar_lea.sflag [#allocation5], 1
    %33 = vsyncpa %s32, 0
    loop: start=0, step=1, limit=4
    $region2: #{bert_classifier_forward.1} parent=1 // loop_pre_header
      _
    $region3: #{bert_classifier_forward.1} parent=1 // loop_header
      %s35 = sphi 0, %s39
      %p36 = scmp.ge.s32.totalorder %s35, 4
      %s45 = sphi 0, %s47
      %s48 = sphi 0, %s45
      %s49 = sphi 0, %s48
      %s65 = sphi 0, %s49
      %s69 = sphi 0, %s69
      %s71 = sphi 0, %s69
      %s72 = sphi 0, %s71
      %s86 = sphi 0, %s72
      %s90 = sphi 0, %s90
      %s92 = sphi 0, %s90
      %s93 = sphi 0, %s92
      %s107 = sphi 0, %s93
      %s111 = sphi 0, %s111
      %s113 = sphi 0, %s111
      %s114 = sphi 0, %s113
      %s128 = sphi 0, %s114
      %s132 = sphi 0, %s132
      %s134 = sphi 0, %s132
      %s135 = sphi 0, %s134
      %s149 = sphi 0, %s135
      %s153 = sphi 0, %s153
      %s155 = sphi 0, %s153
      %s156 = sphi 0, %s155
      %s170 = sphi 0, %s156
      %s174 = sphi 0, %s174
      %s176 = sphi 0, %s174
      %s177 = sphi 0, %s176
      %s191 = sphi 0, %s177
      %s195 = sphi 0, %s195
      %s197 = sphi 0, %s195
      %s198 = sphi 0, %s197
      %s212 = sphi 0, %s198
      %s216 = sphi 0, %s216
      %s218 = sphi 0, %s216
      %s219 = sphi 0, %s218
      %s233 = sphi 0, %s219
      %s237 = sphi 0, %s237
      %s239 = sphi 0, %s237
      %s240 = sphi 0, %s239
      %s254 = sphi 0, %s240
      %s258 = sphi 0, %s258
      %s260 = sphi 0, %s258
      %s261 = sphi 0, %s260
      %s275 = sphi 0, %s261
      %s279 = sphi 0, %s279
      %s281 = sphi 0, %s279
      %s282 = sphi 0, %s281
      %s296 = sphi 0, %s282
      %s300 = sphi 0, %s300
      %s302 = sphi 0, %s300
      %s303 = sphi 0, %s302
      %s317 = sphi 0, %s303
      %s321 = sphi 0, %s321
      %s323 = sphi 0, %s321
      %s324 = sphi 0, %s323
      %s338 = sphi 0, %s324
      %s342 = sphi 0, %s342
      %s344 = sphi 0, %s342
      %s345 = sphi 0, %s344
      %s359 = sphi 0, %s345
      %s363 = sphi 0, %s363
      %s365 = sphi 0, %s363
      %s366 = sphi 0, %s365
      %s380 = sphi 0, %s366
      %s384 = sphi 0, %s384
      %s386 = sphi 0, %s384
      %s387 = sphi 0, %s386
      %s401 = sphi 0, %s387
      %s407 = sphi 0, %s409
      %s410 = sphi 0, %s407
      %s411 = sphi 0, %s410
      %s427 = sphi 0, %s411
    $region4: #{bert_classifier_forward.1} parent=1 // loop_header_branch
      %38 = sbr.rel (%p36) target = $region8
    $region5: #{bert_classifier_forward.1} parent=1 // loop_body
      %s40 = ssub.s32 %s35, 1
      %s41 = ssub.s32 %s35, 2
      %s42 = sadd.s32 %s35, 1
      %s43 = ssub.s32 %s35, %s42
      %p44 = scmp.eq.s32.totalorder %s43, 0
      %s46 = sadd.s32 %s45, 1
      %s47 = scalar_select %p44, %s45, %s46
      %p50 = pneg %p44
      %p51 = scmp.eq.s32.totalorder %s35, 1
      %p52 = por %p50, %p51
      %p53 = scmp.ne.s32.totalorder %s45, %s48
      %p54 = scmp.eq.s32.totalorder %s35, 0
      %p55 = por %p53, %p54
      %p56 = scmp.ne.s32.totalorder %s45, %s48
      %p57 = scmp.eq.s32.totalorder %s40, 1
      %p58 = por %p56, %p57
      %p59 = scmp.ne.s32.totalorder %s48, %s49
      %p60 = scmp.eq.s32.totalorder %s40, 0
      %p61 = por %p59, %p60
      %p62 = scmp.ne.s32.totalorder %s48, %s49
      %p63 = scmp.eq.s32.totalorder %s41, 1
      %p64 = por %p62, %p63
      %p66 = scmp.ne.s32.totalorder %s49, %s65
      %p67 = scmp.eq.s32.totalorder %s41, 0
      %p68 = por %p66, %p67
      %s70 = sadd.s32 %s69, 1
      %p73 = scmp.eq.s32.totalorder %s35, 1
      %p74 = scmp.ne.s32.totalorder %s69, %s71
      %p75 = scmp.eq.s32.totalorder %s35, 0
      %p76 = por %p74, %p75
      %p77 = scmp.ne.s32.totalorder %s69, %s71
      %p78 = scmp.eq.s32.totalorder %s40, 1
      %p79 = por %p77, %p78
      %p80 = scmp.ne.s32.totalorder %s71, %s72
      %p81 = scmp.eq.s32.totalorder %s40, 0
      %p82 = por %p80, %p81
      %p83 = scmp.ne.s32.totalorder %s71, %s72
      %p84 = scmp.eq.s32.totalorder %s41, 1
      %p85 = por %p83, %p84
      %p87 = scmp.ne.s32.totalorder %s72, %s86
      %p88 = scmp.eq.s32.totalorder %s41, 0
      %p89 = por %p87, %p88
      %s91 = sadd.s32 %s90, 1
      %p94 = scmp.eq.s32.totalorder %s35, 1
      %p95 = scmp.ne.s32.totalorder %s90, %s92
      %p96 = scmp.eq.s32.totalorder %s35, 0
      %p97 = por %p95, %p96
      %p98 = scmp.ne.s32.totalorder %s90, %s92
      %p99 = scmp.eq.s32.totalorder %s40, 1
      %p100 = por %p98, %p99
      %p101 = scmp.ne.s32.totalorder %s92, %s93
      %p102 = scmp.eq.s32.totalorder %s40, 0
      %p103 = por %p101, %p102
      %p104 = scmp.ne.s32.totalorder %s92, %s93
      %p105 = scmp.eq.s32.totalorder %s41, 1
      %p106 = por %p104, %p105
      %p108 = scmp.ne.s32.totalorder %s93, %s107
      %p109 = scmp.eq.s32.totalorder %s41, 0
      %p110 = por %p108, %p109
      %s112 = sadd.s32 %s111, 1
      %p115 = scmp.eq.s32.totalorder %s35, 1
      %p116 = scmp.ne.s32.totalorder %s111, %s113
      %p117 = scmp.eq.s32.totalorder %s35, 0
      %p118 = por %p116, %p117
      %p119 = scmp.ne.s32.totalorder %s111, %s113
      %p120 = scmp.eq.s32.totalorder %s40, 1
      %p121 = por %p119, %p120
      %p122 = scmp.ne.s32.totalorder %s113, %s114
      %p123 = scmp.eq.s32.totalorder %s40, 0
      %p124 = por %p122, %p123
      %p125 = scmp.ne.s32.totalorder %s113, %s114
      %p126 = scmp.eq.s32.totalorder %s41, 1
      %p127 = por %p125, %p126
      %p129 = scmp.ne.s32.totalorder %s114, %s128
      %p130 = scmp.eq.s32.totalorder %s41, 0
      %p131 = por %p129, %p130
      %s133 = sadd.s32 %s132, 1
      %p136 = scmp.eq.s32.totalorder %s35, 1
      %p137 = scmp.ne.s32.totalorder %s132, %s134
      %p138 = scmp.eq.s32.totalorder %s35, 0
      %p139 = por %p137, %p138
      %p140 = scmp.ne.s32.totalorder %s132, %s134
      %p141 = scmp.eq.s32.totalorder %s40, 1
      %p142 = por %p140, %p141
      %p143 = scmp.ne.s32.totalorder %s134, %s135
      %p144 = scmp.eq.s32.totalorder %s40, 0
      %p145 = por %p143, %p144
      %p146 = scmp.ne.s32.totalorder %s134, %s135
      %p147 = scmp.eq.s32.totalorder %s41, 1
      %p148 = por %p146, %p147
      %p150 = scmp.ne.s32.totalorder %s135, %s149
      %p151 = scmp.eq.s32.totalorder %s41, 0
      %p152 = por %p150, %p151
      %s154 = sadd.s32 %s153, 1
      %p157 = scmp.eq.s32.totalorder %s35, 1
      %p158 = scmp.ne.s32.totalorder %s153, %s155
      %p159 = scmp.eq.s32.totalorder %s35, 0
      %p160 = por %p158, %p159
      %p161 = scmp.ne.s32.totalorder %s153, %s155
      %p162 = scmp.eq.s32.totalorder %s40, 1
      %p163 = por %p161, %p162
      %p164 = scmp.ne.s32.totalorder %s155, %s156
      %p165 = scmp.eq.s32.totalorder %s40, 0
      %p166 = por %p164, %p165
      %p167 = scmp.ne.s32.totalorder %s155, %s156
      %p168 = scmp.eq.s32.totalorder %s41, 1
      %p169 = por %p167, %p168
      %p171 = scmp.ne.s32.totalorder %s156, %s170
      %p172 = scmp.eq.s32.totalorder %s41, 0
      %p173 = por %p171, %p172
      %s175 = sadd.s32 %s174, 1
      %p178 = scmp.eq.s32.totalorder %s35, 1
      %p179 = scmp.ne.s32.totalorder %s174, %s176
      %p180 = scmp.eq.s32.totalorder %s35, 0
      %p181 = por %p179, %p180
      %p182 = scmp.ne.s32.totalorder %s174, %s176
      %p183 = scmp.eq.s32.totalorder %s40, 1
      %p184 = por %p182, %p183
      %p185 = scmp.ne.s32.totalorder %s176, %s177
      %p186 = scmp.eq.s32.totalorder %s40, 0
      %p187 = por %p185, %p186
      %p188 = scmp.ne.s32.totalorder %s176, %s177
      %p189 = scmp.eq.s32.totalorder %s41, 1
      %p190 = por %p188, %p189
      %p192 = scmp.ne.s32.totalorder %s177, %s191
      %p193 = scmp.eq.s32.totalorder %s41, 0
      %p194 = por %p192, %p193
      %s196 = sadd.s32 %s195, 1
      %p199 = scmp.eq.s32.totalorder %s35, 1
      %p200 = scmp.ne.s32.totalorder %s195, %s197
      %p201 = scmp.eq.s32.totalorder %s35, 0
      %p202 = por %p200, %p201
      %p203 = scmp.ne.s32.totalorder %s195, %s197
      %p204 = scmp.eq.s32.totalorder %s40, 1
      %p205 = por %p203, %p204
      %p206 = scmp.ne.s32.totalorder %s197, %s198
      %p207 = scmp.eq.s32.totalorder %s40, 0
      %p208 = por %p206, %p207
      %p209 = scmp.ne.s32.totalorder %s197, %s198
      %p210 = scmp.eq.s32.totalorder %s41, 1
      %p211 = por %p209, %p210
      %p213 = scmp.ne.s32.totalorder %s198, %s212
      %p214 = scmp.eq.s32.totalorder %s41, 0
      %p215 = por %p213, %p214
      %s217 = sadd.s32 %s216, 1
      %p220 = scmp.eq.s32.totalorder %s35, 1
      %p221 = scmp.ne.s32.totalorder %s216, %s218
      %p222 = scmp.eq.s32.totalorder %s35, 0
      %p223 = por %p221, %p222
      %p224 = scmp.ne.s32.totalorder %s216, %s218
      %p225 = scmp.eq.s32.totalorder %s40, 1
      %p226 = por %p224, %p225
      %p227 = scmp.ne.s32.totalorder %s218, %s219
      %p228 = scmp.eq.s32.totalorder %s40, 0
      %p229 = por %p227, %p228
      %p230 = scmp.ne.s32.totalorder %s218, %s219
      %p231 = scmp.eq.s32.totalorder %s41, 1
      %p232 = por %p230, %p231
      %p234 = scmp.ne.s32.totalorder %s219, %s233
      %p235 = scmp.eq.s32.totalorder %s41, 0
      %p236 = por %p234, %p235
      %s238 = sadd.s32 %s237, 1
      %p241 = scmp.eq.s32.totalorder %s35, 1
      %p242 = scmp.ne.s32.totalorder %s237, %s239
      %p243 = scmp.eq.s32.totalorder %s35, 0
      %p244 = por %p242, %p243
      %p245 = scmp.ne.s32.totalorder %s237, %s239
      %p246 = scmp.eq.s32.totalorder %s40, 1
      %p247 = por %p245, %p246
      %p248 = scmp.ne.s32.totalorder %s239, %s240
      %p249 = scmp.eq.s32.totalorder %s40, 0
      %p250 = por %p248, %p249
      %p251 = scmp.ne.s32.totalorder %s239, %s240
      %p252 = scmp.eq.s32.totalorder %s41, 1
      %p253 = por %p251, %p252
      %p255 = scmp.ne.s32.totalorder %s240, %s254
      %p256 = scmp.eq.s32.totalorder %s41, 0
      %p257 = por %p255, %p256
      %s259 = sadd.s32 %s258, 1
      %p262 = scmp.eq.s32.totalorder %s35, 1
      %p263 = scmp.ne.s32.totalorder %s258, %s260
      %p264 = scmp.eq.s32.totalorder %s35, 0
      %p265 = por %p263, %p264
      %p266 = scmp.ne.s32.totalorder %s258, %s260
      %p267 = scmp.eq.s32.totalorder %s40, 1
      %p268 = por %p266, %p267
      %p269 = scmp.ne.s32.totalorder %s260, %s261
      %p270 = scmp.eq.s32.totalorder %s40, 0
      %p271 = por %p269, %p270
      %p272 = scmp.ne.s32.totalorder %s260, %s261
      %p273 = scmp.eq.s32.totalorder %s41, 1
      %p274 = por %p272, %p273
      %p276 = scmp.ne.s32.totalorder %s261, %s275
      %p277 = scmp.eq.s32.totalorder %s41, 0
      %p278 = por %p276, %p277
      %s280 = sadd.s32 %s279, 1
      %p283 = scmp.eq.s32.totalorder %s35, 1
      %p284 = scmp.ne.s32.totalorder %s279, %s281
      %p285 = scmp.eq.s32.totalorder %s35, 0
      %p286 = por %p284, %p285
      %p287 = scmp.ne.s32.totalorder %s279, %s281
      %p288 = scmp.eq.s32.totalorder %s40, 1
      %p289 = por %p287, %p288
      %p290 = scmp.ne.s32.totalorder %s281, %s282
      %p291 = scmp.eq.s32.totalorder %s40, 0
      %p292 = por %p290, %p291
      %p293 = scmp.ne.s32.totalorder %s281, %s282
      %p294 = scmp.eq.s32.totalorder %s41, 1
      %p295 = por %p293, %p294
      %p297 = scmp.ne.s32.totalorder %s282, %s296
      %p298 = scmp.eq.s32.totalorder %s41, 0
      %p299 = por %p297, %p298
      %s301 = sadd.s32 %s300, 1
      %p304 = scmp.eq.s32.totalorder %s35, 1
      %p305 = scmp.ne.s32.totalorder %s300, %s302
      %p306 = scmp.eq.s32.totalorder %s35, 0
      %p307 = por %p305, %p306
      %p308 = scmp.ne.s32.totalorder %s300, %s302
      %p309 = scmp.eq.s32.totalorder %s40, 1
      %p310 = por %p308, %p309
      %p311 = scmp.ne.s32.totalorder %s302, %s303
      %p312 = scmp.eq.s32.totalorder %s40, 0
      %p313 = por %p311, %p312
      %p314 = scmp.ne.s32.totalorder %s302, %s303
      %p315 = scmp.eq.s32.totalorder %s41, 1
      %p316 = por %p314, %p315
      %p318 = scmp.ne.s32.totalorder %s303, %s317
      %p319 = scmp.eq.s32.totalorder %s41, 0
      %p320 = por %p318, %p319
      %s322 = sadd.s32 %s321, 1
      %p325 = scmp.eq.s32.totalorder %s35, 1
      %p326 = scmp.ne.s32.totalorder %s321, %s323
      %p327 = scmp.eq.s32.totalorder %s35, 0
      %p328 = por %p326, %p327
      %p329 = scmp.ne.s32.totalorder %s321, %s323
      %p330 = scmp.eq.s32.totalorder %s40, 1
      %p331 = por %p329, %p330
      %p332 = scmp.ne.s32.totalorder %s323, %s324
      %p333 = scmp.eq.s32.totalorder %s40, 0
      %p334 = por %p332, %p333
      %p335 = scmp.ne.s32.totalorder %s323, %s324
      %p336 = scmp.eq.s32.totalorder %s41, 1
      %p337 = por %p335, %p336
      %p339 = scmp.ne.s32.totalorder %s324, %s338
      %p340 = scmp.eq.s32.totalorder %s41, 0
      %p341 = por %p339, %p340
      %s343 = sadd.s32 %s342, 1
      %p346 = scmp.eq.s32.totalorder %s35, 1
      %p347 = scmp.ne.s32.totalorder %s342, %s344
      %p348 = scmp.eq.s32.totalorder %s35, 0
      %p349 = por %p347, %p348
      %p350 = scmp.ne.s32.totalorder %s342, %s344
      %p351 = scmp.eq.s32.totalorder %s40, 1
      %p352 = por %p350, %p351
      %p353 = scmp.ne.s32.totalorder %s344, %s345
      %p354 = scmp.eq.s32.totalorder %s40, 0
      %p355 = por %p353, %p354
      %p356 = scmp.ne.s32.totalorder %s344, %s345
      %p357 = scmp.eq.s32.totalorder %s41, 1
      %p358 = por %p356, %p357
      %p360 = scmp.ne.s32.totalorder %s345, %s359
      %p361 = scmp.eq.s32.totalorder %s41, 0
      %p362 = por %p360, %p361
      %s364 = sadd.s32 %s363, 1
      %p367 = scmp.eq.s32.totalorder %s35, 1
      %p368 = scmp.ne.s32.totalorder %s363, %s365
      %p369 = scmp.eq.s32.totalorder %s35, 0
      %p370 = por %p368, %p369
      %p371 = scmp.ne.s32.totalorder %s363, %s365
      %p372 = scmp.eq.s32.totalorder %s40, 1
      %p373 = por %p371, %p372
      %p374 = scmp.ne.s32.totalorder %s365, %s366
      %p375 = scmp.eq.s32.totalorder %s40, 0
      %p376 = por %p374, %p375
      %p377 = scmp.ne.s32.totalorder %s365, %s366
      %p378 = scmp.eq.s32.totalorder %s41, 1
      %p379 = por %p377, %p378
      %p381 = scmp.ne.s32.totalorder %s366, %s380
      %p382 = scmp.eq.s32.totalorder %s41, 0
      %p383 = por %p381, %p382
      %s385 = sadd.s32 %s384, 1
      %p388 = scmp.eq.s32.totalorder %s35, 1
      %p389 = scmp.ne.s32.totalorder %s384, %s386
      %p390 = scmp.eq.s32.totalorder %s35, 0
      %p391 = por %p389, %p390
      %p392 = scmp.ne.s32.totalorder %s384, %s386
      %p393 = scmp.eq.s32.totalorder %s40, 1
      %p394 = por %p392, %p393
      %p395 = scmp.ne.s32.totalorder %s386, %s387
      %p396 = scmp.eq.s32.totalorder %s40, 0
      %p397 = por %p395, %p396
      %p398 = scmp.ne.s32.totalorder %s386, %s387
      %p399 = scmp.eq.s32.totalorder %s41, 1
      %p400 = por %p398, %p399
      %p402 = scmp.ne.s32.totalorder %s387, %s401
      %p403 = scmp.eq.s32.totalorder %s41, 0
      %p404 = por %p402, %p403
      %s405 = ssub.s32 %s35, %s42
      %p406 = scmp.eq.s32.totalorder %s405, 0
      %s408 = sadd.s32 %s407, 1
      %s409 = scalar_select %p406, %s407, %s408
      %p412 = pneg %p406
      %p413 = scmp.eq.s32.totalorder %s35, 1
      %p414 = por %p412, %p413
      %p415 = scmp.ne.s32.totalorder %s407, %s410
      %p416 = scmp.eq.s32.totalorder %s35, 0
      %p417 = por %p415, %p416
      %p418 = scmp.ne.s32.totalorder %s407, %s410
      %p419 = scmp.eq.s32.totalorder %s40, 1
      %p420 = por %p418, %p419
      %p421 = scmp.ne.s32.totalorder %s410, %s411
      %p422 = scmp.eq.s32.totalorder %s40, 0
      %p423 = por %p421, %p422
      %p424 = scmp.ne.s32.totalorder %s410, %s411
      %p425 = scmp.eq.s32.totalorder %s41, 1
      %p426 = por %p424, %p425
      %p428 = scmp.ne.s32.totalorder %s411, %s427
      %p429 = scmp.eq.s32.totalorder %s41, 0
      %p430 = por %p428, %p429
      %p431 = scmp.le.s32.totalorder 1, %s35
      %p432 = scmp.lt.s32.totalorder %s35, 3
      %p433 = pnand %p431, %p432
      %p434 = pneg %p433
      // Predicated region
      $region9: #{bert_classifier_forward.1} parent=5 // pred_check
        _
      $region10: #{bert_classifier_forward.1} parent=5 // pred_check_branch
        %436 = sbr.rel (%p433) target = $region12
      $region11: #{bert_classifier_forward.1} parent=5 // pred_region
        %s437 = ssub.s32 %s35, 1
        // Predicated region
        $region13: #{bert_classifier_forward.1} parent=11 // pred_check
          %p438 = pneg %p82
        $region14: #{bert_classifier_forward.1} parent=11 // pred_check_branch
          %440 = sbr.rel (%p438) target = $region16
        $region15: #{bert_classifier_forward.1} parent=11 // pred_region
          _
        $region16: #{bert_classifier_forward.1} parent=11 // pred_fallthru
          _
        // Predicated region
        $region17: #{bert_classifier_forward.1} parent=11 // pred_check
          %p441 = pneg %p103
        $region18: #{bert_classifier_forward.1} parent=11 // pred_check_branch
          %443 = sbr.rel (%p441) target = $region20
        $region19: #{bert_classifier_forward.1} parent=11 // pred_region
          _
        $region20: #{bert_classifier_forward.1} parent=11 // pred_fallthru
          _
        // Predicated region
        $region21: #{bert_classifier_forward.1} parent=11 // pred_check
          %p444 = pneg %p124
        $region22: #{bert_classifier_forward.1} parent=11 // pred_check_branch
          %446 = sbr.rel (%p444) target = $region24
        $region23: #{bert_classifier_forward.1} parent=11 // pred_region
          _
        $region24: #{bert_classifier_forward.1} parent=11 // pred_fallthru
          _
        // Predicated region
        $region25: #{bert_classifier_forward.1} parent=11 // pred_check
          %p447 = pneg %p145
        $region26: #{bert_classifier_forward.1} parent=11 // pred_check_branch
          %449 = sbr.rel (%p447) target = $region28
        $region27: #{bert_classifier_forward.1} parent=11 // pred_region
          _
        $region28: #{bert_classifier_forward.1} parent=11 // pred_fallthru
          _
        // Predicated region
        $region29: #{bert_classifier_forward.1} parent=11 // pred_check
          %p450 = pneg %p166
        $region30: #{bert_classifier_forward.1} parent=11 // pred_check_branch
          %452 = sbr.rel (%p450) target = $region32
        $region31: #{bert_classifier_forward.1} parent=11 // pred_region
          _
        $region32: #{bert_classifier_forward.1} parent=11 // pred_fallthru
          _
        // Predicated region
        $region33: #{bert_classifier_forward.1} parent=11 // pred_check
          %p453 = pneg %p187
        $region34: #{bert_classifier_forward.1} parent=11 // pred_check_branch
          %455 = sbr.rel (%p453) target = $region36
        $region35: #{bert_classifier_forward.1} parent=11 // pred_region
          _
        $region36: #{bert_classifier_forward.1} parent=11 // pred_fallthru
          _
        // Predicated region
        $region37: #{bert_classifier_forward.1} parent=11 // pred_check
          %p456 = pneg %p208
        $region38: #{bert_classifier_forward.1} parent=11 // pred_check_branch
          %458 = sbr.rel (%p456) target = $region40
        $region39: #{bert_classifier_forward.1} parent=11 // pred_region
          _
        $region40: #{bert_classifier_forward.1} parent=11 // pred_fallthru
          _
        // Predicated region
        $region41: #{bert_classifier_forward.1} parent=11 // pred_check
          %p459 = pneg %p229
        $region42: #{bert_classifier_forward.1} parent=11 // pred_check_branch
          %461 = sbr.rel (%p459) target = $region44
        $region43: #{bert_classifier_forward.1} parent=11 // pred_region
          _
        $region44: #{bert_classifier_forward.1} parent=11 // pred_fallthru
          _
        // Predicated region
        $region45: #{bert_classifier_forward.1} parent=11 // pred_check
          %p462 = pneg %p250
        $region46: #{bert_classifier_forward.1} parent=11 // pred_check_branch
          %464 = sbr.rel (%p462) target = $region48
        $region47: #{bert_classifier_forward.1} parent=11 // pred_region
          _
        $region48: #{bert_classifier_forward.1} parent=11 // pred_fallthru
          _
        // Predicated region
        $region49: #{bert_classifier_forward.1} parent=11 // pred_check
          %p465 = pneg %p271
        $region50: #{bert_classifier_forward.1} parent=11 // pred_check_branch
          %467 = sbr.rel (%p465) target = $region52
        $region51: #{bert_classifier_forward.1} parent=11 // pred_region
          _
        $region52: #{bert_classifier_forward.1} parent=11 // pred_fallthru
          _
        // Predicated region
        $region53: #{bert_classifier_forward.1} parent=11 // pred_check
          %p468 = pneg %p292
        $region54: #{bert_classifier_forward.1} parent=11 // pred_check_branch
          %470 = sbr.rel (%p468) target = $region56
        $region55: #{bert_classifier_forward.1} parent=11 // pred_region
          _
        $region56: #{bert_classifier_forward.1} parent=11 // pred_fallthru
          _
        // Predicated region
        $region57: #{bert_classifier_forward.1} parent=11 // pred_check
          %p471 = pneg %p313
        $region58: #{bert_classifier_forward.1} parent=11 // pred_check_branch
          %473 = sbr.rel (%p471) target = $region60
        $region59: #{bert_classifier_forward.1} parent=11 // pred_region
          _
        $region60: #{bert_classifier_forward.1} parent=11 // pred_fallthru
          _
        // Predicated region
        $region61: #{bert_classifier_forward.1} parent=11 // pred_check
          %p474 = pneg %p334
        $region62: #{bert_classifier_forward.1} parent=11 // pred_check_branch
          %476 = sbr.rel (%p474) target = $region64
        $region63: #{bert_classifier_forward.1} parent=11 // pred_region
          _
        $region64: #{bert_classifier_forward.1} parent=11 // pred_fallthru
          _
        // Predicated region
        $region65: #{bert_classifier_forward.1} parent=11 // pred_check
          %p477 = pneg %p355
        $region66: #{bert_classifier_forward.1} parent=11 // pred_check_branch
          %479 = sbr.rel (%p477) target = $region68
        $region67: #{bert_classifier_forward.1} parent=11 // pred_region
          _
        $region68: #{bert_classifier_forward.1} parent=11 // pred_fallthru
          _
        // Predicated region
        $region69: #{bert_classifier_forward.1} parent=11 // pred_check
          %p480 = pneg %p376
        $region70: #{bert_classifier_forward.1} parent=11 // pred_check_branch
          %482 = sbr.rel (%p480) target = $region72
        $region71: #{bert_classifier_forward.1} parent=11 // pred_region
          _
        $region72: #{bert_classifier_forward.1} parent=11 // pred_fallthru
          _
        // Predicated region
        $region73: #{bert_classifier_forward.1} parent=11 // pred_check
          %p483 = pneg %p397
        $region74: #{bert_classifier_forward.1} parent=11 // pred_check_branch
          %485 = sbr.rel (%p483) target = $region76
        $region75: #{bert_classifier_forward.1} parent=11 // pred_region
          _
        $region76: #{bert_classifier_forward.1} parent=11 // pred_fallthru
          _
      $region12: #{bert_classifier_forward.1} parent=5 // pred_fallthru
        _
      %p486 = scmp.lt.s32.totalorder %s35, 2
      // Predicated region
      $region77: #{bert_classifier_forward.1} parent=5 // pred_check
        %p487 = pneg %p486
      $region78: #{bert_classifier_forward.1} parent=5 // pred_check_branch
        %489 = sbr.rel (%p487) target = $region80
      $region79: #{bert_classifier_forward.1} parent=5 // pred_region
        // Predicated region
        $region81: #{bert_classifier_forward.1} parent=79 // pred_check
          %p490 = pneg %p55
        $region82: #{bert_classifier_forward.1} parent=79 // pred_check_branch
          %492 = sbr.rel (%p490) target = $region84
        $region83: #{bert_classifier_forward.1} parent=79 // pred_region
          %p493 = scmp.lt.s32.totalorder %s35, 1
          %s494 = scalar_select %p493, %s35, 1
          %s495 = smul.addr %s494, 8
          %s496 = scalar_lea.vmem %s1, %s495
        $region84: #{bert_classifier_forward.1} parent=79 // pred_fallthru
          _
      $region80: #{bert_classifier_forward.1} parent=5 // pred_fallthru
        _
      %p497 = scmp.le.s32.totalorder 1, %s35
      %p498 = scmp.lt.s32.totalorder %s35, 3
      %p499 = pnand %p497, %p498
      %p500 = pneg %p499
      // Predicated region
      $region85: #{bert_classifier_forward.1} parent=5 // pred_check
        _
      $region86: #{bert_classifier_forward.1} parent=5 // pred_check_branch
        %502 = sbr.rel (%p499) target = $region88
      $region87: #{bert_classifier_forward.1} parent=5 // pred_region
        %s503 = ssub.s32 %s35, 1
        %p504 = scmp.lt.s32.totalorder %s40, 1
        %s505 = scalar_select %p504, %s40, 1
        %s506 = smul.addr %s505, 8
        %s507 = scalar_lea.vmem %s1, %s506
        %p508 = pneg %p61
        %p509 = pneg %p58
        %p510 = pneg %p82
        %p511 = pneg %p79
        %p512 = pneg %p103
        %p513 = pneg %p100
        %p514 = pneg %p124
        %p515 = pneg %p121
        %p516 = pneg %p145
        %p517 = pneg %p142
        %p518 = pneg %p166
        %p519 = pneg %p163
        %p520 = pneg %p187
        %p521 = pneg %p184
        %p522 = pneg %p208
        %p523 = pneg %p205
        %p524 = pneg %p229
        %p525 = pneg %p226
        %p526 = pneg %p250
        %p527 = pneg %p247
        %p528 = pneg %p271
        %p529 = pneg %p268
        %p530 = pneg %p292
        %p531 = pneg %p289
        %p532 = pneg %p313
        %p533 = pneg %p310
        %p534 = pneg %p334
        %p535 = pneg %p331
        %p536 = pneg %p355
        %p537 = pneg %p352
        %p538 = pneg %p376
        %p539 = pneg %p373
        %p540 = pneg %p397
        %p541 = pneg %p394
        %p542 = pneg %p423
        %p543 = pneg %p420
        %s544 = sand.u32 %s410, 1
        %s545 = scalar_lea.sflag [#allocation5], %s544
        %s546 = sand.u32 %s410, 1
        %s547 = scalar_lea.vmem [#allocation4], %s546
        %p548 = scmp.lt.s32.totalorder %s40, 1
        %s549 = scalar_select %p548, %s40, 1
        %s550 = smul.addr %s549, 8
        %s551 = scalar_lea.vmem %s1, %s550
        %v553 = vld [vmem:[%s551] sm:$0xff]
        %v554 = vld [vmem:[%s2] sm:$0x1]
        %v555 = vld [vmem:[%s3] sm:$0x1]
        %vm556 = vcmask 261120
        %v557 = vsel %vm556, %v553, 0.0
        %558 = vadd.xlane.f32.xlu0 %v557
        %v559 = vpop.xlane.xlu0 %558
        %v560 = vrcp.pop 32.0
        %v561 = vmul.f32 32.0, %v560
        %v562 = vsub.f32 1.0, %v561
        %v563 = vmul.f32 %v560, %v562
        %v564 = vadd.f32 %v560, %v563
        %vm565 = vweird.f32 %v560
        %v566 = vsel %vm565, %v560, %v564
        %v567 = vmul.f32 %v559, %v566
        %v568 = vsub.f32 %v553, %v567
        %v569 = vmul.f32 %v568, %v568
        %v570 = vsel %vm556, %v569, 0.0
        %571 = vadd.xlane.f32.xlu0 %v570
        %v572 = vpop.xlane.xlu0 %571
        %v573 = vmul.f32 %v572, %v566
        %v574 = vadd.f32 %v573, 1e-12
        %v575 = vrsqrt.pop %v574
        %v576 = vmul.f32 %v575, %v574
        %v577 = vmul.f32 %v576, %v575
        %v578 = vmul.f32 0.5, %v577
        %v579 = vsub.f32 1.5, %v578
        %v580 = vmul.f32 %v575, %v579
        %vm581 = vweird.f32 %v574
        %vm582 = vweird.f32 %v575
        %vm583 = vmor %vm581, %vm582
        %v584 = vsel %vm583, %v575, %v580
        %v585 = vmul.f32 %v568, %v584
        %v587 = vperm.slane %v554, 0
        %v589 = vmul.f32 %v585, %v587
        %v591 = vperm.slane %v555, 0
        %v593 = vadd.f32 %v589, %v591
        %s594 = sld [smem:[#allocation3 + %s40]]
        %v595 = vlaneseq
        %v596 = vand.u32 %v595, 127
        %v597 = vstv %s594
        %vm598 = vcmp.lt.s32.totalorder %v596, %v597
        %v599 = vsel %vm598, 0.0, -1e+09
        %v600 = vpack.c.bf16 %v593, %v593
        %v601 = vld [vmem:[%s4] sm:$0xf]
        %v602 = vld [vmem:[%s4 + $0x4] sm:$0xf]
        %v603 = vld [vmem:[%s4 + $0x8] sm:$0xf]
        %v604 = vld [vmem:[%s4 + $0xc] sm:$0xf]
        %v609 = vunpack.c.l.b16 %v601
        %v610 = vunpack.c.l.b16 %v602
        %v611 = vunpack.c.l.b16 %v603
        %v612 = vunpack.c.l.b16 %v604
        %v613 = vpack.c.b16 %v610, %v609
        %v614 = vpack.c.b16 %v612, %v611
        %v618 = vsel %vm556, %v600, 0
        %620 = vmatpush.bf16.msra.mxu0 0
        %621 = vmatpush.bf16.msra.mxu0 0
        %622 = vmatpush.bf16.msra.mxu0 0
        %623 = vmatpush.bf16.msra.mxu0 0
        %624 = vmatpush.bf16.msra.mxu0 0
        %625 = vmatpush.bf16.msra.mxu0 0
        %626 = vmatpush.bf16.msra.mxu0 %v614
        %627 = vmatpush.bf16.msra.mxu0 %v613
        %628 = vmatmul.bf16.gmra.mxu0 %v618
        %v629 = vpop.f32.mrf.mxu0
        %v630 = vadd.f32 0.0, %v629
        %v631 = vpop.f32.mrf.mxu0
        %632 = vdwg.mxu0
        %v633 = vpack.c.bf16 %v630, %v630
        %635 = vrot.lane.b32.xlu0 %v633, 96
        %v636 = vpop.permute.xlu0 %635
        %v638 = vsel %vm556, %v633, 0
        %v641 = vsel %vm556, %v636, 0
        %643 = vmatpush.bf16.xpose.msra.mxu0 0
        %644 = vmatpush.bf16.xpose.msra.mxu0 0
        %645 = vmatpush.bf16.xpose.msra.mxu0 0
        %646 = vmatpush.bf16.xpose.msra.mxu0 0
        %647 = vmatpush.bf16.xpose.msra.mxu0 0
        %648 = vmatpush.bf16.xpose.msra.mxu0 0
        %649 = vmatpush.bf16.xpose.msra.mxu0 0
        %650 = vmatpush.bf16.xpose.msra.mxu0 %v641
        %651 = vmatmul.bf16.gmra.mxu0 %v638
        %v652 = vpop.f32.mrf.mxu0
        %v653 = vadd.f32 %v599, %v652
        %v654 = vpop.f32.mrf.mxu0
        %655 = vdwg.mxu0
        %vm656 = vcmask 64512
        %v657 = vsel %vm656, %v653, -inf
        %658 = vmax.xlane.f32.xlu0 %v657
        %v659 = vpop.xlane.xlu0 %658
        %v660 = vsub.f32 %v653, %v659
        %v661 = vmul.f32 %v660, 1.442695
        %v662 = vpow.pop %v661
        %v663 = vsel %vm656, %v662, 0.0
        %664 = vadd.xlane.f32.xlu0 %v663
        %v665 = vpop.xlane.xlu0 %664
        %v666 = vrcp.pop %v665
        %v667 = vmul.f32 %v662, %v666
        %v668 = vpack.c.bf16 %v667, %v667
        %669 = vrot.lane.b32.xlu0 %v633, 64
        %v670 = vpop.permute.xlu0 %669
        %v672 = vsel %vm656, %v668, 0
        %vm674 = vcmask 1043456
        %v676 = vsel %vm674, %v670, 0
        %678 = vmatpush.bf16.msra.mxu0 0
        %679 = vmatpush.bf16.msra.mxu0 0
        %680 = vmatpush.bf16.msra.mxu0 0
        %681 = vmatpush.bf16.msra.mxu0 0
        %682 = vmatpush.bf16.msra.mxu0 0
        %683 = vmatpush.bf16.msra.mxu0 0
        %684 = vmatpush.bf16.msra.mxu0 0
        %685 = vmatpush.bf16.msra.mxu0 %v676
        %686 = vmatmul.bf16.gmra.mxu0 %v672
        %v687 = vpop.f32.mrf.mxu0
        %v688 = vadd.f32 0.0, %v687
        %v689 = vpop.f32.mrf.mxu0
        %690 = vdwg.mxu0
        %v691 = vpack.c.bf16 %v688, %v688
        %v692 = vld [vmem:[%s5] sm:$0xf]
        %v693 = vld [vmem:[%s5 + $0x4] sm:$0xf]
        %v694 = vld [vmem:[%s5 + $0x8] sm:$0xf]
        %v695 = vld [vmem:[%s5 + $0xc] sm:$0xf]
        %v700 = vunpack.c.l.b16 %v692
        %v701 = vunpack.c.l.b16 %v693
        %v702 = vunpack.c.l.b16 %v694
        %v703 = vunpack.c.l.b16 %v695
        %v704 = vpack.c.b16 %v701, %v700
        %v705 = vpack.c.b16 %v703, %v702
        %v709 = vsel %vm556, %v691, 0
        %711 = vmatpush.bf16.msra.mxu0 0
        %712 = vmatpush.bf16.msra.mxu0 0
        %713 = vmatpush.bf16.msra.mxu0 0
        %714 = vmatpush.bf16.msra.mxu0 0
        %715 = vmatpush.bf16.msra.mxu0 0
        %716 = vmatpush.bf16.msra.mxu0 0
        %717 = vmatpush.bf16.msra.mxu0 %v705
        %718 = vmatpush.bf16.msra.mxu0 %v704
        %719 = vmatmul.bf16.gmra.mxu0 %v709
        %v720 = vpop.f32.mrf.mxu0
        %v721 = vadd.f32 0.0, %v720
        %v722 = vpop.f32.mrf.mxu0
        %723 = vdwg.mxu0
        %v724 = vadd.f32 %v593, %v721
        %v725 = vld [vmem:[%s6] sm:$0x1]
        %v726 = vld [vmem:[%s7] sm:$0x1]
        %v727 = vsel %vm556, %v724, 0.0
        %728 = vadd.xlane.f32.xlu0 %v727
        %v729 = vpop.xlane.xlu0 %728
        %v730 = vmul.f32 %v729, %v566
        %v731 = vsub.f32 %v724, %v730
        %v732 = vmul.f32 %v731, %v731
        %v733 = vsel %vm556, %v732, 0.0
        %734 = vadd.xlane.f32.xlu0 %v733
        %v735 = vpop.xlane.xlu0 %734
        %v736 = vmul.f32 %v735, %v566
        %v737 = vadd.f32 %v736, 1e-12
        %v738 = vrsqrt.pop %v737
        %v739 = vmul.f32 %v738, %v737
        %v740 = vmul.f32 %v739, %v738
        %v741 = vmul.f32 0.5, %v740
        %v742 = vsub.f32 1.5, %v741
        %v743 = vmul.f32 %v738, %v742
        %vm744 = vweird.f32 %v737
        %vm745 = vweird.f32 %v738
        %vm746 = vmor %vm744, %vm745
        %v747 = vsel %vm746, %v738, %v743
        %v748 = vmul.f32 %v731, %v747
        %v750 = vperm.slane %v725, 0
        %v752 = vmul.f32 %v748, %v750
        %v754 = vperm.slane %v726, 0
        %v756 = vadd.f32 %v752, %v754
        %v757 = vpack.c.bf16 %v756, %v756
        %v758 = vld [vmem:[%s8] sm:$0xf]
        %v759 = vld [vmem:[%s8 + $0x4] sm:$0xf]
        %v760 = vld [vmem:[%s8 + $0x8] sm:$0xf]
        %v761 = vld [vmem:[%s8 + $0xc] sm:$0xf]
        %v762 = vld [vmem:[%s9] sm:$0x1]
        %v764 = vperm.slane %v762, 0
        %v770 = vunpack.c.l.b16 %v758
        %v771 = vunpack.c.l.b16 %v759
        %v772 = vunpack.c.l.b16 %v760
        %v773 = vunpack.c.l.b16 %v761
        %v774 = vpack.c.b16 %v771, %v770
        %v775 = vpack.c.b16 %v773, %v772
        %v779 = vsel %vm556, %v757, 0
        %781 = vmatpush.bf16.msra.mxu0 0
        %782 = vmatpush.bf16.msra.mxu0 0
        %783 = vmatpush.bf16.msra.mxu0 0
        %784 = vmatpush.bf16.msra.mxu0 0
        %785 = vmatpush.bf16.msra.mxu0 0
        %786 = vmatpush.bf16.msra.mxu0 0
        %787 = vmatpush.bf16.msra.mxu0 %v775
        %788 = vmatpush.bf16.msra.mxu0 %v774
        %789 = vmatmul.bf16.gmra.mxu0 %v779
        %v790 = vpop.f32.mrf.mxu0
        %v791 = vadd.f32 %v764, %v790
        %v792 = vpop.f32.mrf.mxu0
        %793 = vdwg.mxu0
        %v794 = vmul.f32 %v791, %v791
        %v795 = vmul.f32 %v791, %v794
        %v796 = vmul.f32 %v795, 0.044715
        %v797 = vadd.f32 %v791, %v796
        %v798 = vmul.f32 %v797, 0.7978846
        %v799 = vtanh.pop %v798
        %v800 = vadd.f32 %v799, 1.0
        %v801 = vmul.f32 %v800, 0.5
        %v802 = vmul.f32 %v791, %v801
        %v803 = vpack.c.bf16 %v802, %v802
        %v804 = vld [vmem:[%s10] sm:$0xf]
        %v805 = vld [vmem:[%s10 + $0x4] sm:$0xf]
        %v806 = vld [vmem:[%s10 + $0x8] sm:$0xf]
        %v807 = vld [vmem:[%s10 + $0xc] sm:$0xf]
        %v808 = vld [vmem:[%s10 + $0x10] sm:$0xf]
        %v809 = vld [vmem:[%s10 + $0x14] sm:$0xf]
        %v810 = vld [vmem:[%s10 + $0x18] sm:$0xf]
        %v811 = vld [vmem:[%s10 + $0x1c] sm:$0xf]
        %v812 = vld [vmem:[%s10 + $0x20] sm:$0xf]
        %v813 = vld [vmem:[%s10 + $0x24] sm:$0xf]
        %v814 = vld [vmem:[%s10 + $0x28] sm:$0xf]
        %v815 = vld [vmem:[%s10 + $0x2c] sm:$0xf]
        %v816 = vld [vmem:[%s10 + $0x30] sm:$0xf]
        %v817 = vld [vmem:[%s10 + $0x34] sm:$0xf]
        %v818 = vld [vmem:[%s10 + $0x38] sm:$0xf]
        %v819 = vld [vmem:[%s10 + $0x3c] sm:$0xf]
        %v820 = vld [vmem:[%s11] sm:$0x1]
        %v822 = vperm.slane %v820, 0
        %v840 = vunpack.c.l.b16 %v804
        %v841 = vunpack.c.l.b16 %v805
        %v842 = vunpack.c.l.b16 %v806
        %v843 = vunpack.c.l.b16 %v807
        %v844 = vunpack.c.l.b16 %v808
        %v845 = vunpack.c.l.b16 %v809
        %v846 = vunpack.c.l.b16 %v810
        %v847 = vunpack.c.l.b16 %v811
        %v848 = vunpack.c.l.b16 %v812
        %v849 = vunpack.c.l.b16 %v813
        %v850 = vunpack.c.l.b16 %v814
        %v851 = vunpack.c.l.b16 %v815
        %v852 = vunpack.c.l.b16 %v816
        %v853 = vunpack.c.l.b16 %v817
        %v854 = vunpack.c.l.b16 %v818
        %v855 = vunpack.c.l.b16 %v819
        %v856 = vpack.c.b16 %v841, %v840
        %v857 = vpack.c.b16 %v843, %v842
        %v858 = vpack.c.b16 %v845, %v844
        %v859 = vpack.c.b16 %v847, %v846
        %v860 = vpack.c.b16 %v849, %v848
        %v861 = vpack.c.b16 %v851, %v850
        %v862 = vpack.c.b16 %v853, %v852
        %v863 = vpack.c.b16 %v855, %v854
        %872 = vmatpush.bf16.msra.mxu0 %v863
        %873 = vmatpush.bf16.msra.mxu0 %v862
        %874 = vmatpush.bf16.msra.mxu0 %v861
        %875 = vmatpush.bf16.msra.mxu0 %v860
        %876 = vmatpush.bf16.msra.mxu0 %v859
        %877 = vmatpush.bf16.msra.mxu0 %v858
        %878 = vmatpush.bf16.msra.mxu0 %v857
        %879 = vmatpush.bf16.msra.mxu0 %v856
        %880 = vmatmul.bf16.gmra.mxu0 %v803
        %v881 = vpop.f32.mrf.mxu0
        %v882 = vadd.f32 %v822, %v881
        %v883 = vpop.f32.mrf.mxu0
        %884 = vdwg.mxu0
        %v885 = vadd.f32 %v756, %v882
        %v886 = vld [vmem:[%s12] sm:$0x1]
        %v887 = vld [vmem:[%s13] sm:$0x1]
        %v888 = vsel %vm556, %v885, 0.0
        %889 = vadd.xlane.f32.xlu0 %v888
        %v890 = vpop.xlane.xlu0 %889
        %v891 = vmul.f32 %v890, %v566
        %v892 = vsub.f32 %v885, %v891
        %v893 = vmul.f32 %v892, %v892
        %v894 = vsel %vm556, %v893, 0.0
        %895 = vadd.xlane.f32.xlu0 %v894
        %v896 = vpop.xlane.xlu0 %895
        %v897 = vmul.f32 %v896, %v566
        %v898 = vadd.f32 %v897, 1e-12
        %v899 = vrsqrt.pop %v898
        %v900 = vmul.f32 %v899, %v898
        %v901 = vmul.f32 %v900, %v899
        %v902 = vmul.f32 0.5, %v901
        %v903 = vsub.f32 1.5, %v902
        %v904 = vmul.f32 %v899, %v903
        %vm905 = vweird.f32 %v898
        %vm906 = vweird.f32 %v899
        %vm907 = vmor %vm905, %vm906
        %v908 = vsel %vm907, %v899, %v904
        %v909 = vmul.f32 %v892, %v908
        %v911 = vperm.slane %v886, 0
        %v913 = vmul.f32 %v909, %v911
        %v915 = vperm.slane %v887, 0
        %v917 = vadd.f32 %v913, %v915
        %v918 = vpack.c.bf16 %v917, %v917
        %v919 = vld [vmem:[%s14] sm:$0xf]
        %v920 = vld [vmem:[%s14 + $0x4] sm:$0xf]
        %v921 = vld [vmem:[%s14 + $0x8] sm:$0xf]
        %v922 = vld [vmem:[%s14 + $0xc] sm:$0xf]
        %v923 = vld [vmem:[%s15] sm:$0x1]
        %v928 = vunpack.c.l.b16 %v919
        %v929 = vunpack.c.l.b16 %v920
        %v930 = vunpack.c.l.b16 %v921
        %v931 = vunpack.c.l.b16 %v922
        %v932 = vpack.c.b16 %v929, %v928
        %v933 = vpack.c.b16 %v931, %v930
        %v937 = vsel %vm556, %v918, 0
        %939 = vmatpush.bf16.msra.mxu0 0
        %940 = vmatpush.bf16.msra.mxu0 0
        %941 = vmatpush.bf16.msra.mxu0 0
        %942 = vmatpush.bf16.msra.mxu0 0
        %943 = vmatpush.bf16.msra.mxu0 0
        %944 = vmatpush.bf16.msra.mxu0 0
        %945 = vmatpush.bf16.msra.mxu0 %v933
        %946 = vmatpush.bf16.msra.mxu0 %v932
        %947 = vmatmul.bf16.gmra.mxu0 %v937
        %v948 = vpop.f32.mrf.mxu0
        %v949 = vadd.f32 %v923, %v948
        %v950 = vpop.f32.mrf.mxu0
        %951 = vdwg.mxu0
        %v952 = vtanh.pop %v949
        %v953 = vpack.c.bf16 %v952, %v952
        %v954 = vld [vmem:[%s16] sm:$0xf]
        %v955 = vld [vmem:[%s16 + $0x4] sm:$0xf]
        %v956 = vld [vmem:[%s16 + $0x8] sm:$0xf]
        %v957 = vld [vmem:[%s16 + $0xc] sm:$0xf]
        %v958 = vld [vmem:[%s17] sm:$0x1]
        %v963 = vunpack.c.l.b16 %v954
        %v964 = vunpack.c.l.b16 %v955
        %v965 = vunpack.c.l.b16 %v956
        %v966 = vunpack.c.l.b16 %v957
        %v967 = vpack.c.b16 %v964, %v963
        %v968 = vpack.c.b16 %v966, %v965
        %v972 = vsel %vm556, %v953, 0
        %974 = vmatpush.bf16.msra.mxu0 0
        %975 = vmatpush.bf16.msra.mxu0 0
        %976 = vmatpush.bf16.msra.mxu0 0
        %977 = vmatpush.bf16.msra.mxu0 0
        %978 = vmatpush.bf16.msra.mxu0 0
        %979 = vmatpush.bf16.msra.mxu0 0
        %980 = vmatpush.bf16.msra.mxu0 %v968
        %981 = vmatpush.bf16.msra.mxu0 %v967
        %982 = vmatmul.bf16.gmra.mxu0 %v972
        %v983 = vpop.f32.mrf.mxu0
        %v984 = vadd.f32 %v958, %v983
        %v985 = vpop.f32.mrf.mxu0
        %986 = vdwg.mxu0
        %987 = vst [vmem:[%s547] sm:$0x1] %v984
        %s988 = sand.u32 %s410, 1
        %s989 = scalar_lea.sflag [#allocation5], %s988
        %s990 = sand.u32 %s410, 1
        %s991 = scalar_lea.vmem [#allocation4], %s990
        // Predicated region
        $region89: #{bert_classifier_forward.1} parent=87 // pred_check
          %p992 = pneg %p420
        $region90: #{bert_classifier_forward.1} parent=87 // pred_check_branch
          %994 = sbr.rel (%p992) target = $region92
        $region91: #{bert_classifier_forward.1} parent=87 // pred_region
          %996 = vsyncadd %s989, 0
          %s997 = scalar_lea.hbm %s18, %s40
          %s999 = sshll.u32 %s991, 4
          %s1000 = int_to_ptr.vmem [resolvable:$true] %s999
          %s1001 = sshll.u32 %s997, 4
          %s1002 = int_to_ptr.hbm [resolvable:$true] %s1001
          %1004 = dma.vmem_to_hbm [thread:$0]  %s1000, 16, %s1002, %s989
        $region92: #{bert_classifier_forward.1} parent=87 // pred_fallthru
          _
      $region88: #{bert_classifier_forward.1} parent=5 // pred_fallthru
        _
      %p1005 = scmp.le.s32.totalorder 2, %s35
      // Predicated region
      $region93: #{bert_classifier_forward.1} parent=5 // pred_check
        %p1006 = pneg %p1005
      $region94: #{bert_classifier_forward.1} parent=5 // pred_check_branch
        %1008 = sbr.rel (%p1006) target = $region96
      $region95: #{bert_classifier_forward.1} parent=5 // pred_region
        %s1009 = ssub.s32 %s35, 2
        // Predicated region
        $region97: #{bert_classifier_forward.1} parent=95 // pred_check
          %p1010 = pneg %p426
        $region98: #{bert_classifier_forward.1} parent=95 // pred_check_branch
          %1012 = sbr.rel (%p1010) target = $region100
        $region99: #{bert_classifier_forward.1} parent=95 // pred_region
          %s1013 = sand.u32 %s411, 1
          %s1014 = scalar_lea.sflag [#allocation5], %s1013
          %s1015 = sand.u32 %s411, 1
          %s1016 = scalar_lea.vmem [#allocation4], %s1015
          %1018 = dma.done %s1014, 16
        $region100: #{bert_classifier_forward.1} parent=95 // pred_fallthru
          _
      $region96: #{bert_classifier_forward.1} parent=5 // pred_fallthru
        _
    $region6: #{bert_classifier_forward.1} parent=1 // loop_footer
      %s39 = sadd.s32 1, %s35
    $region7: #{bert_classifier_forward.1} parent=1 // loop_footer_branch
      %34 = sbr.rel target = $region3
    $region8: #{bert_classifier_forward.1} parent=1 // loop_exit
      _
    %1019 = vsyncpa [#allocation5], 1
    %s1020 = scalar_lea.sflag [#allocation5], 1
    %1021 = vsyncpa %s1020, 1

</llo_original>
